<compile_context>
chip_gen: v6e
topology: v6e:2x2x1
jax: 0.10.0
libtpu: 0.0.40
codegen_flags: <defaults>
</compile_context>

<pallas_src>
import jax
import jax.numpy as jnp
from jax.experimental import pallas as pl
from jax.experimental.pallas import tpu as pltpu

# ---------------- config ----------------
L2_NORMALIZE = True
DOT_PRODUCT = False
LOSS_COMMITMENT = 0.25
LOSS_ENTROPY = 0.0          # entropy branch disabled (see TODO below)
LOSS_PERPLEXITY = 0.1
EPS = 1e-6

# TODO(synk): entropy_loss_fn is an external function not defined in the
# reference module; quantizer_loss_entropy=0 so the entropy path is skipped.
# TODO(synk): strawman_codebook / top_k_rnd / top_k_avg branches are not
# exercised by this config and are not implemented.
# TODO(synk): forward-only. Training gradients (stop_gradient split between
# e_latent / q_latent terms) would need a custom_vjp around the pallas_call.
# TODO(synk): distance-path matmuls kept in f32 so argmin matches the f32
# reference; cast them to bf16 only after tie-stability validation.


def _round_up(a, b):
    return ((a + b - 1) // b) * b


def _full_spec(shape):
    nd = len(shape)
    return pl.BlockSpec(shape, lambda *_, _nd=nd: (0,) * _nd)


# -------- kernel 1: codebook preprocessing (runs once, tiny) --------
#   latcb = l2norm(codebook @ W2 + b2)             (C, H)   f32  -> distances
#   fused = [codebook | codebook @ W2 + b2]        (C, L+H) bf16 -> one-hot gather
def codebook_prep_kernel(cb_ref, w2_ref, b2_ref, latcb_ref, fused_ref):
    cb = cb_ref[...].astype(jnp.float32)                               # (C, L)
    lat = jnp.dot(cb, w2_ref[...],
                  preferred_element_type=jnp.float32) + b2_ref[...]    # (C, H)
    if L2_NORMALIZE:
        latn = lat * jax.lax.rsqrt(jnp.sum(lat * lat, axis=1, keepdims=True) + EPS)
    else:
        latn = lat
    latcb_ref[...] = latn
    # b2 folded in here: enc rows sum to exactly 1, so enc@(lat) == gather of lat.
    fused_ref[...] = jnp.concatenate([cb, lat], axis=1).astype(jnp.bfloat16)


# -------- kernel 2: main quantizer hot path, tiled over N --------
def make_quantizer_kernel(tile_n, n_actual, need_mask, latent_dim):
    def kernel(x_ref, w1_ref, b1_ref, latcb_ref, fused_ref,
               idx_ref, colsum_ref, stats_ref):
        pid = pl.program_id(0)

        x = x_ref[...].astype(jnp.float32)                             # (TN, D)
        latx = jnp.dot(x, w1_ref[...],
                       preferred_element_type=jnp.float32) + b1_ref[...]
        z = latx
        if L2_NORMALIZE:
            z = z * jax.lax.rsqrt(jnp.sum(z * z, axis=1, keepdims=True) + EPS)

        ab = jnp.dot(z, latcb_ref[...].T,
                     preferred_element_type=jnp.float32)               # (TN, C)
        TN, C = ab.shape
        col = jax.lax.broadcasted_iota(jnp.int32, (TN, C), 1)

        if DOT_PRODUCT:
            # distances == ab, topk(largest=False) -> argmin of ab
            best = jnp.min(ab, axis=1, keepdims=True)
            hit = ab == best
        elif L2_NORMALIZE:
            # d = ||z||^2 - 2*ab + ||latcb_c||^2; the first term is per-row
            # constant and the l2-normalized codebook norms are all 1 +- ~1e-8,
            # so argmin(d) == argmax(ab).  Valid ONLY because raw distances are
            # never returned from this kernel.
            best = jnp.max(ab, axis=1, keepdims=True)
            hit = ab == best
        else:
            # TODO(synk): non-normalized euclidean path would need the codebook
            # squared-norm row (cbn2) added back; not exercised by this config.
            d = -2.0 * ab
            best = jnp.min(d, axis=1, keepdims=True)
            hit = d == best

        idx = jnp.min(jnp.where(hit, col, C), axis=1, keepdims=True)   # (TN,1) i32
        enc = (col == idx).astype(jnp.float32)                         # (TN, C)
        idx_ref[...] = idx

        # one fused bf16 gather: enc @ [codebook | codebook@W2+b2]
        gathered = jnp.dot(enc.astype(jnp.bfloat16), fused_ref[...],
                           preferred_element_type=jnp.float32)         # (TN, L+H)
        quant = gathered[:, :latent_dim]                               # ~codebook[idx]
        latq = gathered[:, latent_dim:]                                # ~code_to_latent

        # per-tile partial sums for the two MSE losses + encodings column sum
        e1 = jnp.sum((quant - x) ** 2, axis=1, keepdims=True)          # (TN, 1)
        e2 = jnp.sum((latq - latx) ** 2, axis=1, keepdims=True)        # (TN, 1)
        if need_mask:
            row = pid * tile_n + jax.lax.broadcasted_iota(jnp.int32, (TN, 1), 0)
            valid = (row < n_actual).astype(jnp.float32)
            e1 = e1 * valid
            e2 = e2 * valid
            enc = enc * valid

        colsum_ref[0] = jnp.sum(enc, axis=0, keepdims=True)            # (1, C)
        s1 = jnp.sum(e1, axis=0, keepdims=True)                        # (1, 1)
        s2 = jnp.sum(e2, axis=0, keepdims=True)                        # (1, 1)
        lane = jax.lax.broadcasted_iota(jnp.int32, (1, 128), 1)
        stats_ref[0] = jnp.where(lane == 0, s1, jnp.where(lane == 1, s2, 0.0))

    return kernel


# ---------------- wrapper ----------------
def language_quantizer_forward(x, params, train=True, tile_n=512):
    # tile_n=512 default; keeps num_tiles even / >=2 for reasonable N so both
    # v7x TensorCores stay busy via the "parallel" grid axis.
    B, T, D = x.shape
    w1, b1 = params["input_to_latent"]     # (D, H), (1, H)
    w2, b2 = params["code_to_latent"]      # (L, H), (1, H)
    codebook = params["codebook"]          # (C, L), L == D
    C, L = codebook.shape
    H = w1.shape[1]
    assert L == D, "quantizer_latent_dim must equal hidden_dim"

    x_flat = x.reshape(-1, D)              # no dtype cast here; cast in-kernel
    N = x_flat.shape[0]
    tile_n = min(tile_n, _round_up(N, 8))
    n_pad = _round_up(N, tile_n)
    need_mask = n_pad != N
    if need_mask:
        x_flat = jnp.pad(x_flat, ((0, n_pad - N), (0, 0)))
    num_tiles = n_pad // tile_n

    cb32 = codebook.astype(jnp.float32)

    # ---- kernel 1: codebook preprocessing (once) ----
    latcb, fused = pl.pallas_call(
        codebook_prep_kernel,
        out_shape=(
            jax.ShapeDtypeStruct((C, H), jnp.float32),
            jax.ShapeDtypeStruct((C, L + H), jnp.bfloat16),
        ),
        grid=(1,),
        in_specs=[_full_spec((C, L)), _full_spec((L, H)), _full_spec((1, H))],
        out_specs=(_full_spec((C, H)), _full_spec((C, L + H))),
        compiler_params=pltpu.CompilerParams(dimension_semantics=("arbitrary",)),
    )(cb32, w2.astype(jnp.float32), b2.astype(jnp.float32))

    # ---- kernel 2: main quantizer, tiled over N ----
    kernel = make_quantizer_kernel(tile_n, N, need_mask, L)
    inv = lambda i: (0, 0)
    idx_out, colsum_out, stats_out = pl.pallas_call(
        kernel,
        out_shape=(
            jax.ShapeDtypeStruct((n_pad, 1), jnp.int32),            # encoding indices
            jax.ShapeDtypeStruct((num_tiles, 1, C), jnp.float32),   # enc col-sums
            jax.ShapeDtypeStruct((num_tiles, 1, 128), jnp.float32), # sqerr partials
        ),
        grid=(num_tiles,),
        in_specs=[
            pl.BlockSpec((tile_n, D), lambda i: (i, 0)),            # x tile
            pl.BlockSpec((D, H), inv),                              # w1
            pl.BlockSpec((1, H), inv),                              # b1
            pl.BlockSpec((C, H), inv),                              # latent codebook
            pl.BlockSpec((C, L + H), inv),                          # fused gather mat
        ],
        out_specs=(
            pl.BlockSpec((tile_n, 1), lambda i: (i, 0)),
            pl.BlockSpec((1, 1, C), lambda i: (i, 0, 0)),
            pl.BlockSpec((1, 1, 128), lambda i: (i, 0, 0)),
        ),
        compiler_params=pltpu.CompilerParams(
            dimension_semantics=("parallel",),
            vmem_limit_bytes=32 * 1024 * 1024,
        ),
    )(x_flat, w1.astype(jnp.float32), b1.astype(jnp.float32), latcb, fused)

    # Exact reconstructions outside the kernel (keeps the kernel store path
    # tiny and the returned values free of bf16 rounding).
    idx_flat = idx_out[:N, 0]
    encoding_indices = idx_flat.reshape(B, T)
    encodings = jax.nn.one_hot(encoding_indices, C, dtype=jnp.float32)
    quantized = jnp.take(cb32, idx_flat, axis=0).reshape(B, T, L)

    colsum = jnp.sum(colsum_out[:, 0, :], axis=0)                   # (C,)
    stats = jnp.sum(stats_out[:, 0, :], axis=0)                     # (128,)
    sq1, sq2 = stats[0], stats[1]

    result = {}
    if train:
        mse1 = sq1 / jnp.float32(N * D)          # mean((quantized - x)^2)
        mse2 = sq2 / jnp.float32(N * H)          # mean((latq - latx)^2)
        e_lat = (mse1 + mse2) * LOSS_COMMITMENT
        q_lat = mse1 + mse2
        entropy = jnp.float32(0.0)
        result = dict(
            quantizer_loss=e_lat + q_lat + 2.0 * entropy,
            e_latent_loss=e_lat,
            q_latent_loss=q_lat,
            entropy_loss=2.0 * entropy,
        )
        # straight-through estimator; forward value equals `quantized`
        quantized = x + jax.lax.stop_gradient(quantized - x)

    avg_probs = colsum / jnp.float32(N)
    log_perplexity = -jnp.sum(avg_probs * jnp.log(avg_probs + 1e-6))
    perplexity = jnp.exp(log_perplexity)
    if "quantizer_loss" in result:
        result["quantizer_loss"] = result["quantizer_loss"] + LOSS_PERPLEXITY * log_perplexity
    result.update({
        "encodings": encodings,
        "encoding_indices": encoding_indices,
        "raw": x,
        "perplexity": perplexity,
    })
    return quantized, result


# ---------------- pure-JAX reference (for a sanity check) ----------------
def reference_forward(x, params):
    w1, b1 = params["input_to_latent"]
    w2, b2 = params["code_to_latent"]
    codebook = params["codebook"]
    C = codebook.shape[0]
    B, T, D = x.shape
    H = w1.shape[1]
    xf = x.reshape(-1, D)

    def l2n(v):
        return v * jax.lax.rsqrt(jnp.sum(v * v, axis=1, keepdims=True) + EPS)

    hp = jax.lax.Precision.HIGHEST
    latx = jnp.dot(xf, w1, precision=hp) + b1
    z = l2n(latx)
    lcb = l2n(jnp.dot(codebook, w2, precision=hp) + b2)
    a2 = jnp.sum(z * z, axis=1, keepdims=True)
    b2d = jnp.sum(lcb * lcb, axis=1)[None, :]
    d = a2 - 2.0 * jnp.dot(z, lcb.T, precision=hp) + b2d
    idx = jnp.argmin(d, axis=-1)
    quant = codebook[idx]
    latq = jnp.dot(quant, w2, precision=hp) + b2

    mse1 = jnp.mean((quant - xf) ** 2)
    mse2 = jnp.mean((latq - latx) ** 2)
    enc = jax.nn.one_hot(idx, C, dtype=jnp.float32)
    avg = jnp.mean(enc, axis=0)
    logp = -jnp.sum(avg * jnp.log(avg + 1e-6))
    loss = (LOSS_COMMITMENT * mse1 + mse1) + (LOSS_COMMITMENT * mse2 + mse2) \
        + LOSS_PERPLEXITY * logp
    return (idx.reshape(B, T), quant.reshape(B, T, D), loss, jnp.exp(logp))


if __name__ == "__main__":
    B, T = 2, 512        # batch, sequence -> N = 1024 rows = 2 tiles of 512
    D = 256              # hidden_dim (== quantizer_latent_dim so shapes match)
    H = 128              # quantizer_hidden_dim
    L = 256              # quantizer_latent_dim (codebook embedding dim)
    C = 512              # codebook size

    key = jax.random.PRNGKey(0)
    k_x, k_cb, k_w1, k_b1, k_w2, k_b2 = jax.random.split(key, 6)
    x = jax.random.normal(k_x, (B, T, D), jnp.float32)
    params = {
        "codebook": jax.random.normal(k_cb, (C, L), jnp.float32) * 0.5,
        "input_to_latent": (jax.random.normal(k_w1, (D, H), jnp.float32) * 0.1,
                            jax.random.normal(k_b1, (1, H), jnp.float32) * 0.02),
        "code_to_latent": (jax.random.normal(k_w2, (L, H), jnp.float32) * 0.1,
                           jax.random.normal(k_b2, (1, H), jnp.float32) * 0.02),
    }

    quantized, result = language_quantizer_forward(x, params, train=True)
    jax.block_until_ready(quantized)
    jax.block_until_ready(result["quantizer_loss"])

    # sanity check against a pure-JAX reference
    idx_ref, quant_ref, loss_ref, perp_ref = reference_forward(x, params)
    assert jnp.allclose(result["raw"], x)
    # Near-ties at f32 resolution can legitimately pick either code (kernel vs
    # XLA f32 matmul rounding differs by ~1e-6), so allow a tiny mismatch rate
    # and only compare quantized rows where the indices agree.
    idx_match = result["encoding_indices"] == idx_ref
    match_frac = float(jnp.mean(idx_match.astype(jnp.float32)))
    assert match_frac >= 0.999, f"index match fraction {match_frac}"
    row_ok = idx_match[..., None]
    assert bool(jnp.all(jnp.where(row_ok, jnp.abs(quantized - quant_ref), 0.0) < 1e-3))
    assert jnp.allclose(result["quantizer_loss"], loss_ref, rtol=1e-2, atol=1e-4)
    assert jnp.allclose(result["perplexity"], perp_ref, rtol=1e-2, atol=1e-4)
    assert bool(jnp.all(jnp.isfinite(result["perplexity"])))
    assert quantized.shape == (B, T, D)
    assert result["encodings"].shape == (B, T, C)
    assert result["encoding_indices"].shape == (B, T)

    print("KERNEL_OK")
</pallas_src>

<mosaic_0001>
module attributes {stable_mosaic.version = 11 : i64} {
  func.func @codebook_prep_kernel(%arg0: i32, %arg1: memref<512x256xf32, #tpu.memory_space<vmem>>, %arg2: memref<256x128xf32, #tpu.memory_space<vmem>>, %arg3: memref<1x128xf32, #tpu.memory_space<vmem>>, %arg4: memref<512x128xf32, #tpu.memory_space<vmem>>, %arg5: memref<512x384xbf16, #tpu.memory_space<vmem>>) attributes {dimension_semantics = [#tpu.dimension_semantics<arbitrary>], iteration_bounds = array<i64: 1>, scalar_prefetch = 0 : i64, scratch_operands = 0 : i64, tpu.core_type = #tpu.core_type<tc>, window_params = [{pipeline_mode = #tpu.pipeline_mode<synchronous>, transform_indices = @transform_0, window_bounds = array<i64: 512, 256>}, {pipeline_mode = #tpu.pipeline_mode<synchronous>, transform_indices = @transform_1, window_bounds = array<i64: 256, 128>}, {pipeline_mode = #tpu.pipeline_mode<synchronous>, transform_indices = @transform_2, window_bounds = array<i64: 1, 128>}, {pipeline_mode = #tpu.pipeline_mode<synchronous>, transform_indices = @transform_3, window_bounds = array<i64: 512, 128>}, {pipeline_mode = #tpu.pipeline_mode<synchronous>, transform_indices = @transform_4, window_bounds = array<i64: 512, 384>}]} {
    %c0 = arith.constant 0 : index
    %c0_0 = arith.constant 0 : index
    %0 = vector.load %arg1[%c0, %c0_0] : memref<512x256xf32, #tpu.memory_space<vmem>>, vector<512x256xf32>
    %c0_1 = arith.constant 0 : index
    %c0_2 = arith.constant 0 : index
    %1 = vector.load %arg2[%c0_1, %c0_2] : memref<256x128xf32, #tpu.memory_space<vmem>>, vector<256x128xf32>
    %cst = arith.constant dense<0.000000e+00> : vector<512x128xf32>
    %2 = tpu.matmul %0, %1, %cst {dimension_numbers = #tpu.dot_dimension_numbers<[1], [0], [0], [1], [0, 0, 1, 1], [], []>} : vector<512x256xf32>, vector<256x128xf32>, vector<512x128xf32> -> vector<512x128xf32>
    %c0_3 = arith.constant 0 : index
    %c0_4 = arith.constant 0 : index
    %3 = vector.load %arg3[%c0_3, %c0_4] : memref<1x128xf32, #tpu.memory_space<vmem>>, vector<1x128xf32>
    %4 = vector.broadcast %3 : vector<1x128xf32> to vector<512x128xf32>
    %5 = arith.addf %2, %4 : vector<512x128xf32>
    %6 = arith.mulf %5, %5 : vector<512x128xf32>
    %cst_5 = arith.constant dense<0.000000e+00> : vector<512xf32>
    %7 = vector.multi_reduction <add>, %6, %cst_5 [1] : vector<512x128xf32> to vector<512xf32>
    %8 = vector.shape_cast %7 : vector<512xf32> to vector<512x1xf32>
    %cst_6 = arith.constant 9.99999997E-7 : f32
    %9 = vector.broadcast %cst_6 : f32 to vector<512x1xf32>
    %10 = arith.addf %8, %9 : vector<512x1xf32>
    %11 = math.rsqrt %10 : vector<512x1xf32>
    %12 = vector.broadcast %11 : vector<512x1xf32> to vector<512x128xf32>
    %13 = arith.mulf %5, %12 : vector<512x128xf32>
    %c0_7 = arith.constant 0 : index
    %c0_8 = arith.constant 0 : index
    %14 = vector.load %arg4[%c0_7, %c0_8] : memref<512x128xf32, #tpu.memory_space<vmem>>, vector<512x128xf32>
    tpu.vector_store %arg4[%c0_7, %c0_8], %13 {strides = array<i32>} : memref<512x128xf32, #tpu.memory_space<vmem>>, vector<512x128xf32>,
    %15 = tpu.concatenate %0, %5 in 1 : vector<512x256xf32>, vector<512x128xf32> -> vector<512x384xf32>
    %16 = arith.truncf %15 : vector<512x384xf32> to vector<512x384xbf16>
    %c0_9 = arith.constant 0 : index
    %c0_10 = arith.constant 0 : index
    %17 = vector.load %arg5[%c0_9, %c0_10] : memref<512x384xbf16, #tpu.memory_space<vmem>>, vector<512x384xbf16>
    tpu.vector_store %arg5[%c0_9, %c0_10], %16 {strides = array<i32>} : memref<512x384xbf16, #tpu.memory_space<vmem>>, vector<512x384xbf16>,
    return
  }
  func.func @transform_0(%arg0: i32) -> (i32, i32) {
    %c0_i32 = arith.constant 0 : i32
    %c0_i32_0 = arith.constant 0 : i32
    %c0_i32_1 = arith.constant 0 : i32
    return %c0_i32, %c0_i32_0 : i32, i32
  }
  func.func @transform_1(%arg0: i32) -> (i32, i32) {
    %c0_i32 = arith.constant 0 : i32
    %c0_i32_0 = arith.constant 0 : i32
    %c0_i32_1 = arith.constant 0 : i32
    return %c0_i32, %c0_i32_0 : i32, i32
  }
  func.func @transform_2(%arg0: i32) -> (i32, i32) {
    %c0_i32 = arith.constant 0 : i32
    %c0_i32_0 = arith.constant 0 : i32
    %c0_i32_1 = arith.constant 0 : i32
    return %c0_i32, %c0_i32_0 : i32, i32
  }
  func.func @transform_3(%arg0: i32) -> (i32, i32) {
    %c0_i32 = arith.constant 0 : i32
    %c0_i32_0 = arith.constant 0 : i32
    %c0_i32_1 = arith.constant 0 : i32
    return %c0_i32, %c0_i32_0 : i32, i32
  }
  func.func @transform_4(%arg0: i32) -> (i32, i32) {
    %c0_i32 = arith.constant 0 : i32
    %c0_i32_0 = arith.constant 0 : i32
    %c0_i32_1 = arith.constant 0 : i32
    return %c0_i32, %c0_i32_0 : i32, i32
  }
}

</mosaic_0001>

<llo_original>
// kernel: tpu_custom_call.1
$region0: #{tpu_custom_call.1}
  #allocation0 [shape = 'u32[]', space=smem, size = 0x4, offset = 0x4, fixed_abs, tag = 'smem constant byte address 0x4 - core index']
  #allocation1 [shape = 'u32[144,128]{1,0:T(1,128)}', space=vmem, size = 0x12000, scoped, tag = 'internal scratch']
  %s0 = inlined_call_operand.hbm [shape: f32[512,256], index: 0, kind: input, shape index: {}]
  %s1 = inlined_call_operand.hbm [shape: f32[256,128], index: 1, kind: input, shape index: {}]
  %s2 = inlined_call_operand.vmem [shape: f32[1,128], index: 2, kind: input, shape index: {}]
  %s3 = inlined_call_operand.hbm [shape: f32[512,128], index: 3, kind: output, shape index: {0}]
  %s4 = inlined_call_operand.hbm [shape: bf16[512,384], index: 4, kind: output, shape index: {1}]
  %5 = xla_tuple %s3, %s4
  %s6 = sld [smem:[#allocation0]]
  $region38: #{tpu_custom_call.1} parent=0
    _
  %s8 = ssub.s32 1, %s6
  %s9 = scalar_select 0, %s8, %s6
  $region1: #{tpu_custom_call.1} parent=0
    #allocation2 [shape = 'u8[524288]{0}', space=vmem, size = 0x80000, scoped, tag = 'input window, operand 0, single buffered']
    #allocation3 [shape = 's32[1]{0}', space=sflag, size = 0x4, scoped, tag = 'scoped memory for tpu_custom_call.1']
    #allocation4 [shape = 's32[1]{0}', space=sflag, size = 0x4, scoped, tag = 'scoped memory for tpu_custom_call.1']
    #allocation5 [shape = 'u8[131072]{0}', space=vmem, size = 0x20000, scoped, tag = 'input window, operand 1, single buffered']
    #allocation6 [shape = 's32[1]{0}', space=sflag, size = 0x4, scoped, tag = 'scoped memory for tpu_custom_call.1']
    #allocation7 [shape = 'u8[262144]{0}', space=vmem, size = 0x40000, scoped, tag = 'output window, operand 0, single buffered']
    #allocation8 [shape = 'u8[393216]{0}', space=vmem, size = 0x60000, scoped, tag = 'output window, operand 1, single buffered']
    #allocation9 [shape = 's32[1]{0}', space=sflag, size = 0x4, scoped, tag = 'scoped memory for tpu_custom_call.1']
    %10 = vsyncpa [#allocation3], 0
    %11 = vsyncpa [#allocation6], 0
    %12 = vsyncpa [#allocation4], 0
    %13 = vsyncpa [#allocation9], 0
    // Predicated region
    $region2: #{tpu_custom_call.1} parent=1 // pred_check
      _
    $region3: #{tpu_custom_call.1} parent=1 // pred_check_branch
      %15 = sbr.rel (0) target = $region5
    $region4: #{tpu_custom_call.1} parent=1 // pred_region
      %s17 = ssub.s32 16384, 16384
      %18 = vsyncadd [#allocation3], %s17
      %s19 = sshll.u32 [#allocation2], 4
      %s20 = int_to_ptr.vmem [resolvable:$true] %s19
      %25 = dma.hbm_to_vmem [thread:$0]  %s0, 16384, %s20, [#allocation3], 256, 256, 16
    $region5: #{tpu_custom_call.1} parent=1 // pred_fallthru
      _
    // Predicated region
    $region6: #{tpu_custom_call.1} parent=1 // pred_check
      _
    $region7: #{tpu_custom_call.1} parent=1 // pred_check_branch
      %27 = sbr.rel (0) target = $region9
    $region8: #{tpu_custom_call.1} parent=1 // pred_region
      %s29 = ssub.s32 4096, 4096
      %30 = vsyncadd [#allocation6], %s29
      %s31 = sshll.u32 [#allocation5], 4
      %s32 = int_to_ptr.vmem [resolvable:$true] %s31
      %37 = dma.hbm_to_vmem [thread:$0]  %s1, 4096, %s32, [#allocation6], 128, 128, 8
    $region9: #{tpu_custom_call.1} parent=1 // pred_fallthru
      _
    // Predicated region
    $region10: #{tpu_custom_call.1} parent=1 // pred_check
      _
    $region11: #{tpu_custom_call.1} parent=1 // pred_check_branch
      %39 = sbr.rel (0) target = $region13
    $region12: #{tpu_custom_call.1} parent=1 // pred_region
      _
    $region13: #{tpu_custom_call.1} parent=1 // pred_fallthru
      _
    // Predicated region
    $region14: #{tpu_custom_call.1} parent=1 // pred_check
      _
    $region15: #{tpu_custom_call.1} parent=1 // pred_check_branch
      %41 = sbr.rel (0) target = $region17
    $region16: #{tpu_custom_call.1} parent=1 // pred_region
      %42 = dma.done [#allocation3], 16384
    $region17: #{tpu_custom_call.1} parent=1 // pred_fallthru
      _
    // Predicated region
    $region18: #{tpu_custom_call.1} parent=1 // pred_check
      _
    $region19: #{tpu_custom_call.1} parent=1 // pred_check_branch
      %44 = sbr.rel (0) target = $region21
    $region20: #{tpu_custom_call.1} parent=1 // pred_region
      %45 = dma.done [#allocation6], 4096
    $region21: #{tpu_custom_call.1} parent=1 // pred_fallthru
      _
    %v46 = vld [vmem:[#allocation2] sm:$0xff]
    %v47 = vld [vmem:[#allocation2 + $0x8] sm:$0xff]
    %v48 = vld [vmem:[#allocation2 + $0x10] sm:$0xff]
    %v49 = vld [vmem:[#allocation2 + $0x18] sm:$0xff]
    %v50 = vld [vmem:[#allocation2 + $0x20] sm:$0xff]
    %v51 = vld [vmem:[#allocation2 + $0x28] sm:$0xff]
    %v52 = vld [vmem:[#allocation2 + $0x30] sm:$0xff]
    %v53 = vld [vmem:[#allocation2 + $0x38] sm:$0xff]
    %v54 = vld [vmem:[#allocation2 + $0x40] sm:$0xff]
    %v55 = vld [vmem:[#allocation2 + $0x48] sm:$0xff]
    %v56 = vld [vmem:[#allocation2 + $0x50] sm:$0xff]
    %v57 = vld [vmem:[#allocation2 + $0x58] sm:$0xff]
    %v58 = vld [vmem:[#allocation2 + $0x60] sm:$0xff]
    %v59 = vld [vmem:[#allocation2 + $0x68] sm:$0xff]
    %v60 = vld [vmem:[#allocation2 + $0x70] sm:$0xff]
    %v61 = vld [vmem:[#allocation2 + $0x78] sm:$0xff]
    %v62 = vld [vmem:[#allocation2 + $0x80] sm:$0xff]
    %v63 = vld [vmem:[#allocation2 + $0x88] sm:$0xff]
    %v64 = vld [vmem:[#allocation2 + $0x90] sm:$0xff]
    %v65 = vld [vmem:[#allocation2 + $0x98] sm:$0xff]
    %v66 = vld [vmem:[#allocation2 + $0xa0] sm:$0xff]
    %v67 = vld [vmem:[#allocation2 + $0xa8] sm:$0xff]
    %v68 = vld [vmem:[#allocation2 + $0xb0] sm:$0xff]
    %v69 = vld [vmem:[#allocation2 + $0xb8] sm:$0xff]
    %v70 = vld [vmem:[#allocation2 + $0xc0] sm:$0xff]
    %v71 = vld [vmem:[#allocation2 + $0xc8] sm:$0xff]
    %v72 = vld [vmem:[#allocation2 + $0xd0] sm:$0xff]
    %v73 = vld [vmem:[#allocation2 + $0xd8] sm:$0xff]
    %v74 = vld [vmem:[#allocation2 + $0xe0] sm:$0xff]
    %v75 = vld [vmem:[#allocation2 + $0xe8] sm:$0xff]
    %v76 = vld [vmem:[#allocation2 + $0xf0] sm:$0xff]
    %v77 = vld [vmem:[#allocation2 + $0xf8] sm:$0xff]
    %v78 = vld [vmem:[#allocation2 + $0x100] sm:$0xff]
    %v79 = vld [vmem:[#allocation2 + $0x108] sm:$0xff]
    %v80 = vld [vmem:[#allocation2 + $0x110] sm:$0xff]
    %v81 = vld [vmem:[#allocation2 + $0x118] sm:$0xff]
    %v82 = vld [vmem:[#allocation2 + $0x120] sm:$0xff]
    %v83 = vld [vmem:[#allocation2 + $0x128] sm:$0xff]
    %v84 = vld [vmem:[#allocation2 + $0x130] sm:$0xff]
    %v85 = vld [vmem:[#allocation2 + $0x138] sm:$0xff]
    %v86 = vld [vmem:[#allocation2 + $0x140] sm:$0xff]
    %v87 = vld [vmem:[#allocation2 + $0x148] sm:$0xff]
    %v88 = vld [vmem:[#allocation2 + $0x150] sm:$0xff]
    %v89 = vld [vmem:[#allocation2 + $0x158] sm:$0xff]
    %v90 = vld [vmem:[#allocation2 + $0x160] sm:$0xff]
    %v91 = vld [vmem:[#allocation2 + $0x168] sm:$0xff]
    %v92 = vld [vmem:[#allocation2 + $0x170] sm:$0xff]
    %v93 = vld [vmem:[#allocation2 + $0x178] sm:$0xff]
    %v94 = vld [vmem:[#allocation2 + $0x180] sm:$0xff]
    %v95 = vld [vmem:[#allocation2 + $0x188] sm:$0xff]
    %v96 = vld [vmem:[#allocation2 + $0x190] sm:$0xff]
    %v97 = vld [vmem:[#allocation2 + $0x198] sm:$0xff]
    %v98 = vld [vmem:[#allocation2 + $0x1a0] sm:$0xff]
    %v99 = vld [vmem:[#allocation2 + $0x1a8] sm:$0xff]
    %v100 = vld [vmem:[#allocation2 + $0x1b0] sm:$0xff]
    %v101 = vld [vmem:[#allocation2 + $0x1b8] sm:$0xff]
    %v102 = vld [vmem:[#allocation2 + $0x1c0] sm:$0xff]
    %v103 = vld [vmem:[#allocation2 + $0x1c8] sm:$0xff]
    %v104 = vld [vmem:[#allocation2 + $0x1d0] sm:$0xff]
    %v105 = vld [vmem:[#allocation2 + $0x1d8] sm:$0xff]
    %v106 = vld [vmem:[#allocation2 + $0x1e0] sm:$0xff]
    %v107 = vld [vmem:[#allocation2 + $0x1e8] sm:$0xff]
    %v108 = vld [vmem:[#allocation2 + $0x1f0] sm:$0xff]
    %v109 = vld [vmem:[#allocation2 + $0x1f8] sm:$0xff]
    %v110 = vld [vmem:[#allocation2 + $0x200] sm:$0xff]
    %v111 = vld [vmem:[#allocation2 + $0x208] sm:$0xff]
    %v112 = vld [vmem:[#allocation2 + $0x210] sm:$0xff]
    %v113 = vld [vmem:[#allocation2 + $0x218] sm:$0xff]
    %v114 = vld [vmem:[#allocation2 + $0x220] sm:$0xff]
    %v115 = vld [vmem:[#allocation2 + $0x228] sm:$0xff]
    %v116 = vld [vmem:[#allocation2 + $0x230] sm:$0xff]
    %v117 = vld [vmem:[#allocation2 + $0x238] sm:$0xff]
    %v118 = vld [vmem:[#allocation2 + $0x240] sm:$0xff]
    %v119 = vld [vmem:[#allocation2 + $0x248] sm:$0xff]
    %v120 = vld [vmem:[#allocation2 + $0x250] sm:$0xff]
    %v121 = vld [vmem:[#allocation2 + $0x258] sm:$0xff]
    %v122 = vld [vmem:[#allocation2 + $0x260] sm:$0xff]
    %v123 = vld [vmem:[#allocation2 + $0x268] sm:$0xff]
    %v124 = vld [vmem:[#allocation2 + $0x270] sm:$0xff]
    %v125 = vld [vmem:[#allocation2 + $0x278] sm:$0xff]
    %v126 = vld [vmem:[#allocation2 + $0x280] sm:$0xff]
    %v127 = vld [vmem:[#allocation2 + $0x288] sm:$0xff]
    %v128 = vld [vmem:[#allocation2 + $0x290] sm:$0xff]
    %v129 = vld [vmem:[#allocation2 + $0x298] sm:$0xff]
    %v130 = vld [vmem:[#allocation2 + $0x2a0] sm:$0xff]
    %v131 = vld [vmem:[#allocation2 + $0x2a8] sm:$0xff]
    %v132 = vld [vmem:[#allocation2 + $0x2b0] sm:$0xff]
    %v133 = vld [vmem:[#allocation2 + $0x2b8] sm:$0xff]
    %v134 = vld [vmem:[#allocation2 + $0x2c0] sm:$0xff]
    %v135 = vld [vmem:[#allocation2 + $0x2c8] sm:$0xff]
    %v136 = vld [vmem:[#allocation2 + $0x2d0] sm:$0xff]
    %v137 = vld [vmem:[#allocation2 + $0x2d8] sm:$0xff]
    %v138 = vld [vmem:[#allocation2 + $0x2e0] sm:$0xff]
    %v139 = vld [vmem:[#allocation2 + $0x2e8] sm:$0xff]
    %v140 = vld [vmem:[#allocation2 + $0x2f0] sm:$0xff]
    %v141 = vld [vmem:[#allocation2 + $0x2f8] sm:$0xff]
    %v142 = vld [vmem:[#allocation2 + $0x300] sm:$0xff]
    %v143 = vld [vmem:[#allocation2 + $0x308] sm:$0xff]
    %v144 = vld [vmem:[#allocation2 + $0x310] sm:$0xff]
    %v145 = vld [vmem:[#allocation2 + $0x318] sm:$0xff]
    %v146 = vld [vmem:[#allocation2 + $0x320] sm:$0xff]
    %v147 = vld [vmem:[#allocation2 + $0x328] sm:$0xff]
    %v148 = vld [vmem:[#allocation2 + $0x330] sm:$0xff]
    %v149 = vld [vmem:[#allocation2 + $0x338] sm:$0xff]
    %v150 = vld [vmem:[#allocation2 + $0x340] sm:$0xff]
    %v151 = vld [vmem:[#allocation2 + $0x348] sm:$0xff]
    %v152 = vld [vmem:[#allocation2 + $0x350] sm:$0xff]
    %v153 = vld [vmem:[#allocation2 + $0x358] sm:$0xff]
    %v154 = vld [vmem:[#allocation2 + $0x360] sm:$0xff]
    %v155 = vld [vmem:[#allocation2 + $0x368] sm:$0xff]
    %v156 = vld [vmem:[#allocation2 + $0x370] sm:$0xff]
    %v157 = vld [vmem:[#allocation2 + $0x378] sm:$0xff]
    %v158 = vld [vmem:[#allocation2 + $0x380] sm:$0xff]
    %v159 = vld [vmem:[#allocation2 + $0x388] sm:$0xff]
    %v160 = vld [vmem:[#allocation2 + $0x390] sm:$0xff]
    %v161 = vld [vmem:[#allocation2 + $0x398] sm:$0xff]
    %v162 = vld [vmem:[#allocation2 + $0x3a0] sm:$0xff]
    %v163 = vld [vmem:[#allocation2 + $0x3a8] sm:$0xff]
    %v164 = vld [vmem:[#allocation2 + $0x3b0] sm:$0xff]
    %v165 = vld [vmem:[#allocation2 + $0x3b8] sm:$0xff]
    %v166 = vld [vmem:[#allocation2 + $0x3c0] sm:$0xff]
    %v167 = vld [vmem:[#allocation2 + $0x3c8] sm:$0xff]
    %v168 = vld [vmem:[#allocation2 + $0x3d0] sm:$0xff]
    %v169 = vld [vmem:[#allocation2 + $0x3d8] sm:$0xff]
    %v170 = vld [vmem:[#allocation2 + $0x3e0] sm:$0xff]
    %v171 = vld [vmem:[#allocation2 + $0x3e8] sm:$0xff]
    %v172 = vld [vmem:[#allocation2 + $0x3f0] sm:$0xff]
    %v173 = vld [vmem:[#allocation2 + $0x3f8] sm:$0xff]
    %v174 = vld [vmem:[#allocation5] sm:$0xff]
    %v175 = vld [vmem:[#allocation5 + $0x8] sm:$0xff]
    %v176 = vld [vmem:[#allocation5 + $0x10] sm:$0xff]
    %v177 = vld [vmem:[#allocation5 + $0x18] sm:$0xff]
    %v178 = vld [vmem:[#allocation5 + $0x20] sm:$0xff]
    %v179 = vld [vmem:[#allocation5 + $0x28] sm:$0xff]
    %v180 = vld [vmem:[#allocation5 + $0x30] sm:$0xff]
    %v181 = vld [vmem:[#allocation5 + $0x38] sm:$0xff]
    %v182 = vld [vmem:[#allocation5 + $0x40] sm:$0xff]
    %v183 = vld [vmem:[#allocation5 + $0x48] sm:$0xff]
    %v184 = vld [vmem:[#allocation5 + $0x50] sm:$0xff]
    %v185 = vld [vmem:[#allocation5 + $0x58] sm:$0xff]
    %v186 = vld [vmem:[#allocation5 + $0x60] sm:$0xff]
    %v187 = vld [vmem:[#allocation5 + $0x68] sm:$0xff]
    %v188 = vld [vmem:[#allocation5 + $0x70] sm:$0xff]
    %v189 = vld [vmem:[#allocation5 + $0x78] sm:$0xff]
    %v190 = vld [vmem:[#allocation5 + $0x80] sm:$0xff]
    %v191 = vld [vmem:[#allocation5 + $0x88] sm:$0xff]
    %v192 = vld [vmem:[#allocation5 + $0x90] sm:$0xff]
    %v193 = vld [vmem:[#allocation5 + $0x98] sm:$0xff]
    %v194 = vld [vmem:[#allocation5 + $0xa0] sm:$0xff]
    %v195 = vld [vmem:[#allocation5 + $0xa8] sm:$0xff]
    %v196 = vld [vmem:[#allocation5 + $0xb0] sm:$0xff]
    %v197 = vld [vmem:[#allocation5 + $0xb8] sm:$0xff]
    %v198 = vld [vmem:[#allocation5 + $0xc0] sm:$0xff]
    %v199 = vld [vmem:[#allocation5 + $0xc8] sm:$0xff]
    %v200 = vld [vmem:[#allocation5 + $0xd0] sm:$0xff]
    %v201 = vld [vmem:[#allocation5 + $0xd8] sm:$0xff]
    %v202 = vld [vmem:[#allocation5 + $0xe0] sm:$0xff]
    %v203 = vld [vmem:[#allocation5 + $0xe8] sm:$0xff]
    %v204 = vld [vmem:[#allocation5 + $0xf0] sm:$0xff]
    %v205 = vld [vmem:[#allocation5 + $0xf8] sm:$0xff]
    %v206 = vld [vmem:[%s2] sm:$0x1]
    %v208 = vlaneseq
    %v209 = vshrl.u32 %v208, 7
    %v210 = vsub.s32 0, %v209
    %v211 = vrot.slane %v206, %v210
    %213 = vmatprep.subr.mxu0 0.0
    %214 = vmatpush1.msra.mxu0 %v189
    %215 = vmatprep.subr.mxu0 0.0
    %216 = vmatpush1.msra.mxu0 %v188
    %217 = vmatprep.subr.mxu0 0.0
    %218 = vmatpush1.msra.mxu0 %v187
    %219 = vmatprep.subr.mxu0 0.0
    %220 = vmatpush1.msra.mxu0 %v186
    %221 = vmatprep.subr.mxu0 0.0
    %222 = vmatpush1.msra.mxu0 %v185
    %223 = vmatprep.subr.mxu0 0.0
    %224 = vmatpush1.msra.mxu0 %v184
    %225 = vmatprep.subr.mxu0 0.0
    %226 = vmatpush1.msra.mxu0 %v183
    %227 = vmatprep.subr.mxu0 0.0
    %228 = vmatpush1.msra.mxu0 %v182
    %229 = vmatprep.subr.mxu0 0.0
    %230 = vmatpush1.msra.mxu0 %v181
    %231 = vmatprep.subr.mxu0 0.0
    %232 = vmatpush1.msra.mxu0 %v180
    %233 = vmatprep.subr.mxu0 0.0
    %234 = vmatpush1.msra.mxu0 %v179
    %235 = vmatprep.subr.mxu0 0.0
    %236 = vmatpush1.msra.mxu0 %v178
    %237 = vmatprep.subr.mxu0 0.0
    %238 = vmatpush1.msra.mxu0 %v177
    %239 = vmatprep.subr.mxu0 0.0
    %240 = vmatpush1.msra.mxu0 %v176
    %241 = vmatprep.subr.mxu0 0.0
    %242 = vmatpush1.msra.mxu0 %v175
    %243 = vmatprep.subr.mxu0 0.0
    %244 = vmatpush1.msra.mxu0 %v174
    %245 = vmatprep.subr.mxu0 0.0
    %246 = vmatpush2.msra.mxu0 %v205
    %247 = vmatprep.subr.mxu0 0.0
    %248 = vmatpush2.msra.mxu0 %v204
    %249 = vmatprep.subr.mxu0 0.0
    %250 = vmatpush2.msra.mxu0 %v203
    %251 = vmatprep.subr.mxu0 0.0
    %252 = vmatpush2.msra.mxu0 %v202
    %253 = vmatprep.subr.mxu0 0.0
    %254 = vmatpush2.msra.mxu0 %v201
    %255 = vmatprep.subr.mxu0 0.0
    %256 = vmatpush2.msra.mxu0 %v200
    %257 = vmatprep.subr.mxu0 0.0
    %258 = vmatpush2.msra.mxu0 %v199
    %259 = vmatprep.subr.mxu0 0.0
    %260 = vmatpush2.msra.mxu0 %v198
    %261 = vmatprep.subr.mxu0 0.0
    %262 = vmatpush2.msra.mxu0 %v197
    %263 = vmatprep.subr.mxu0 0.0
    %264 = vmatpush2.msra.mxu0 %v196
    %265 = vmatprep.subr.mxu0 0.0
    %266 = vmatpush2.msra.mxu0 %v195
    %267 = vmatprep.subr.mxu0 0.0
    %268 = vmatpush2.msra.mxu0 %v194
    %269 = vmatprep.subr.mxu0 0.0
    %270 = vmatpush2.msra.mxu0 %v193
    %271 = vmatprep.subr.mxu0 0.0
    %272 = vmatpush2.msra.mxu0 %v192
    %273 = vmatprep.subr.mxu0 0.0
    %274 = vmatpush2.msra.mxu0 %v191
    %275 = vmatprep.subr.mxu0 0.0
    %276 = vmatpush2.msra.mxu0 %v190
    %277 = vmatprep.mubr.f32.mxu0 %v47
    %278 = vmatmul.mubr.f32.gmra.mxu0 %v46
    %v279 = vpop.f32.mrf.mxu0
    %v280 = vadd.f32 %v211, %v279
    %v281 = vpop.f32.mrf.mxu0
    %282 = vmatprep.mubr.f32.mxu0 %v49
    %283 = vmatmul.mubr.f32.gmra.mxu0 %v48
    %v284 = vpop.f32.mrf.mxu0
    %v285 = vadd.f32 %v211, %v284
    %v286 = vpop.f32.mrf.mxu0
    %287 = vmatprep.mubr.f32.mxu0 %v51
    %288 = vmatmul.mubr.f32.gmra.mxu0 %v50
    %v289 = vpop.f32.mrf.mxu0
    %v290 = vadd.f32 %v211, %v289
    %v291 = vpop.f32.mrf.mxu0
    %292 = vmatprep.mubr.f32.mxu0 %v53
    %293 = vmatmul.mubr.f32.gmra.mxu0 %v52
    %v294 = vpop.f32.mrf.mxu0
    %v295 = vadd.f32 %v211, %v294
    %v296 = vpop.f32.mrf.mxu0
    %297 = vmatprep.mubr.f32.mxu0 %v55
    %298 = vmatmul.mubr.f32.gmra.mxu0 %v54
    %v299 = vpop.f32.mrf.mxu0
    %v300 = vadd.f32 %v211, %v299
    %v301 = vpop.f32.mrf.mxu0
    %302 = vmatprep.mubr.f32.mxu0 %v57
    %303 = vmatmul.mubr.f32.gmra.mxu0 %v56
    %v304 = vpop.f32.mrf.mxu0
    %v305 = vadd.f32 %v211, %v304
    %v306 = vpop.f32.mrf.mxu0
    %307 = vmatprep.mubr.f32.mxu0 %v59
    %308 = vmatmul.mubr.f32.gmra.mxu0 %v58
    %v309 = vpop.f32.mrf.mxu0
    %v310 = vadd.f32 %v211, %v309
    %v311 = vpop.f32.mrf.mxu0
    %312 = vmatprep.mubr.f32.mxu0 %v61
    %313 = vmatmul.mubr.f32.gmra.mxu0 %v60
    %v314 = vpop.f32.mrf.mxu0
    %v315 = vadd.f32 %v211, %v314
    %v316 = vpop.f32.mrf.mxu0
    %317 = vmatprep.mubr.f32.mxu0 %v63
    %318 = vmatmul.mubr.f32.gmra.mxu0 %v62
    %v319 = vpop.f32.mrf.mxu0
    %v320 = vadd.f32 %v211, %v319
    %v321 = vpop.f32.mrf.mxu0
    %322 = vmatprep.mubr.f32.mxu0 %v65
    %323 = vmatmul.mubr.f32.gmra.mxu0 %v64
    %v324 = vpop.f32.mrf.mxu0
    %v325 = vadd.f32 %v211, %v324
    %v326 = vpop.f32.mrf.mxu0
    %327 = vmatprep.mubr.f32.mxu0 %v67
    %328 = vmatmul.mubr.f32.gmra.mxu0 %v66
    %v329 = vpop.f32.mrf.mxu0
    %v330 = vadd.f32 %v211, %v329
    %v331 = vpop.f32.mrf.mxu0
    %332 = vmatprep.mubr.f32.mxu0 %v69
    %333 = vmatmul.mubr.f32.gmra.mxu0 %v68
    %v334 = vpop.f32.mrf.mxu0
    %v335 = vadd.f32 %v211, %v334
    %v336 = vpop.f32.mrf.mxu0
    %337 = vmatprep.mubr.f32.mxu0 %v71
    %338 = vmatmul.mubr.f32.gmra.mxu0 %v70
    %v339 = vpop.f32.mrf.mxu0
    %v340 = vadd.f32 %v211, %v339
    %v341 = vpop.f32.mrf.mxu0
    %342 = vmatprep.mubr.f32.mxu0 %v73
    %343 = vmatmul.mubr.f32.gmra.mxu0 %v72
    %v344 = vpop.f32.mrf.mxu0
    %v345 = vadd.f32 %v211, %v344
    %v346 = vpop.f32.mrf.mxu0
    %347 = vmatprep.mubr.f32.mxu0 %v75
    %348 = vmatmul.mubr.f32.gmra.mxu0 %v74
    %v349 = vpop.f32.mrf.mxu0
    %v350 = vadd.f32 %v211, %v349
    %v351 = vpop.f32.mrf.mxu0
    %352 = vmatprep.mubr.f32.mxu0 %v77
    %353 = vmatmul.mubr.f32.gmra.mxu0 %v76
    %v354 = vpop.f32.mrf.mxu0
    %v355 = vadd.f32 %v211, %v354
    %v356 = vpop.f32.mrf.mxu0
    %357 = vmatprep.mubr.f32.mxu0 %v79
    %358 = vmatmul.mubr.f32.gmra.mxu0 %v78
    %v359 = vpop.f32.mrf.mxu0
    %v360 = vadd.f32 %v211, %v359
    %v361 = vpop.f32.mrf.mxu0
    %362 = vmatprep.mubr.f32.mxu0 %v81
    %363 = vmatmul.mubr.f32.gmra.mxu0 %v80
    %v364 = vpop.f32.mrf.mxu0
    %v365 = vadd.f32 %v211, %v364
    %v366 = vpop.f32.mrf.mxu0
    %367 = vmatprep.mubr.f32.mxu0 %v83
    %368 = vmatmul.mubr.f32.gmra.mxu0 %v82
    %v369 = vpop.f32.mrf.mxu0
    %v370 = vadd.f32 %v211, %v369
    %v371 = vpop.f32.mrf.mxu0
    %372 = vmatprep.mubr.f32.mxu0 %v85
    %373 = vmatmul.mubr.f32.gmra.mxu0 %v84
    %v374 = vpop.f32.mrf.mxu0
    %v375 = vadd.f32 %v211, %v374
    %v376 = vpop.f32.mrf.mxu0
    %377 = vmatprep.mubr.f32.mxu0 %v87
    %378 = vmatmul.mubr.f32.gmra.mxu0 %v86
    %v379 = vpop.f32.mrf.mxu0
    %v380 = vadd.f32 %v211, %v379
    %v381 = vpop.f32.mrf.mxu0
    %382 = vmatprep.mubr.f32.mxu0 %v89
    %383 = vmatmul.mubr.f32.gmra.mxu0 %v88
    %v384 = vpop.f32.mrf.mxu0
    %v385 = vadd.f32 %v211, %v384
    %v386 = vpop.f32.mrf.mxu0
    %387 = vmatprep.mubr.f32.mxu0 %v91
    %388 = vmatmul.mubr.f32.gmra.mxu0 %v90
    %v389 = vpop.f32.mrf.mxu0
    %v390 = vadd.f32 %v211, %v389
    %v391 = vpop.f32.mrf.mxu0
    %392 = vmatprep.mubr.f32.mxu0 %v93
    %393 = vmatmul.mubr.f32.gmra.mxu0 %v92
    %v394 = vpop.f32.mrf.mxu0
    %v395 = vadd.f32 %v211, %v394
    %v396 = vpop.f32.mrf.mxu0
    %397 = vmatprep.mubr.f32.mxu0 %v95
    %398 = vmatmul.mubr.f32.gmra.mxu0 %v94
    %v399 = vpop.f32.mrf.mxu0
    %v400 = vadd.f32 %v211, %v399
    %v401 = vpop.f32.mrf.mxu0
    %402 = vmatprep.mubr.f32.mxu0 %v97
    %403 = vmatmul.mubr.f32.gmra.mxu0 %v96
    %v404 = vpop.f32.mrf.mxu0
    %v405 = vadd.f32 %v211, %v404
    %v406 = vpop.f32.mrf.mxu0
    %407 = vmatprep.mubr.f32.mxu0 %v99
    %408 = vmatmul.mubr.f32.gmra.mxu0 %v98
    %v409 = vpop.f32.mrf.mxu0
    %v410 = vadd.f32 %v211, %v409
    %v411 = vpop.f32.mrf.mxu0
    %412 = vmatprep.mubr.f32.mxu0 %v101
    %413 = vmatmul.mubr.f32.gmra.mxu0 %v100
    %v414 = vpop.f32.mrf.mxu0
    %v415 = vadd.f32 %v211, %v414
    %v416 = vpop.f32.mrf.mxu0
    %417 = vmatprep.mubr.f32.mxu0 %v103
    %418 = vmatmul.mubr.f32.gmra.mxu0 %v102
    %v419 = vpop.f32.mrf.mxu0
    %v420 = vadd.f32 %v211, %v419
    %v421 = vpop.f32.mrf.mxu0
    %422 = vmatprep.mubr.f32.mxu0 %v105
    %423 = vmatmul.mubr.f32.gmra.mxu0 %v104
    %v424 = vpop.f32.mrf.mxu0
    %v425 = vadd.f32 %v211, %v424
    %v426 = vpop.f32.mrf.mxu0
    %427 = vmatprep.mubr.f32.mxu0 %v107
    %428 = vmatmul.mubr.f32.gmra.mxu0 %v106
    %v429 = vpop.f32.mrf.mxu0
    %v430 = vadd.f32 %v211, %v429
    %v431 = vpop.f32.mrf.mxu0
    %432 = vmatprep.mubr.f32.mxu0 %v109
    %433 = vmatmul.mubr.f32.gmra.mxu0 %v108
    %v434 = vpop.f32.mrf.mxu0
    %v435 = vadd.f32 %v211, %v434
    %v436 = vpop.f32.mrf.mxu0
    %437 = vmatprep.mubr.f32.mxu0 %v111
    %438 = vmatmul.mubr.f32.gmra.mxu0 %v110
    %v439 = vpop.f32.mrf.mxu0
    %v440 = vadd.f32 %v211, %v439
    %v441 = vpop.f32.mrf.mxu0
    %442 = vmatprep.mubr.f32.mxu0 %v113
    %443 = vmatmul.mubr.f32.gmra.mxu0 %v112
    %v444 = vpop.f32.mrf.mxu0
    %v445 = vadd.f32 %v211, %v444
    %v446 = vpop.f32.mrf.mxu0
    %447 = vmatprep.mubr.f32.mxu0 %v115
    %448 = vmatmul.mubr.f32.gmra.mxu0 %v114
    %v449 = vpop.f32.mrf.mxu0
    %v450 = vadd.f32 %v211, %v449
    %v451 = vpop.f32.mrf.mxu0
    %452 = vmatprep.mubr.f32.mxu0 %v117
    %453 = vmatmul.mubr.f32.gmra.mxu0 %v116
    %v454 = vpop.f32.mrf.mxu0
    %v455 = vadd.f32 %v211, %v454
    %v456 = vpop.f32.mrf.mxu0
    %457 = vmatprep.mubr.f32.mxu0 %v119
    %458 = vmatmul.mubr.f32.gmra.mxu0 %v118
    %v459 = vpop.f32.mrf.mxu0
    %v460 = vadd.f32 %v211, %v459
    %v461 = vpop.f32.mrf.mxu0
    %462 = vmatprep.mubr.f32.mxu0 %v121
    %463 = vmatmul.mubr.f32.gmra.mxu0 %v120
    %v464 = vpop.f32.mrf.mxu0
    %v465 = vadd.f32 %v211, %v464
    %v466 = vpop.f32.mrf.mxu0
    %467 = vmatprep.mubr.f32.mxu0 %v123
    %468 = vmatmul.mubr.f32.gmra.mxu0 %v122
    %v469 = vpop.f32.mrf.mxu0
    %v470 = vadd.f32 %v211, %v469
    %v471 = vpop.f32.mrf.mxu0
    %472 = vmatprep.mubr.f32.mxu0 %v125
    %473 = vmatmul.mubr.f32.gmra.mxu0 %v124
    %v474 = vpop.f32.mrf.mxu0
    %v475 = vadd.f32 %v211, %v474
    %v476 = vpop.f32.mrf.mxu0
    %477 = vmatprep.mubr.f32.mxu0 %v127
    %478 = vmatmul.mubr.f32.gmra.mxu0 %v126
    %v479 = vpop.f32.mrf.mxu0
    %v480 = vadd.f32 %v211, %v479
    %v481 = vpop.f32.mrf.mxu0
    %482 = vmatprep.mubr.f32.mxu0 %v129
    %483 = vmatmul.mubr.f32.gmra.mxu0 %v128
    %v484 = vpop.f32.mrf.mxu0
    %v485 = vadd.f32 %v211, %v484
    %v486 = vpop.f32.mrf.mxu0
    %487 = vmatprep.mubr.f32.mxu0 %v131
    %488 = vmatmul.mubr.f32.gmra.mxu0 %v130
    %v489 = vpop.f32.mrf.mxu0
    %v490 = vadd.f32 %v211, %v489
    %v491 = vpop.f32.mrf.mxu0
    %492 = vmatprep.mubr.f32.mxu0 %v133
    %493 = vmatmul.mubr.f32.gmra.mxu0 %v132
    %v494 = vpop.f32.mrf.mxu0
    %v495 = vadd.f32 %v211, %v494
    %v496 = vpop.f32.mrf.mxu0
    %497 = vmatprep.mubr.f32.mxu0 %v135
    %498 = vmatmul.mubr.f32.gmra.mxu0 %v134
    %v499 = vpop.f32.mrf.mxu0
    %v500 = vadd.f32 %v211, %v499
    %v501 = vpop.f32.mrf.mxu0
    %502 = vmatprep.mubr.f32.mxu0 %v137
    %503 = vmatmul.mubr.f32.gmra.mxu0 %v136
    %v504 = vpop.f32.mrf.mxu0
    %v505 = vadd.f32 %v211, %v504
    %v506 = vpop.f32.mrf.mxu0
    %507 = vmatprep.mubr.f32.mxu0 %v139
    %508 = vmatmul.mubr.f32.gmra.mxu0 %v138
    %v509 = vpop.f32.mrf.mxu0
    %v510 = vadd.f32 %v211, %v509
    %v511 = vpop.f32.mrf.mxu0
    %512 = vmatprep.mubr.f32.mxu0 %v141
    %513 = vmatmul.mubr.f32.gmra.mxu0 %v140
    %v514 = vpop.f32.mrf.mxu0
    %v515 = vadd.f32 %v211, %v514
    %v516 = vpop.f32.mrf.mxu0
    %517 = vmatprep.mubr.f32.mxu0 %v143
    %518 = vmatmul.mubr.f32.gmra.mxu0 %v142
    %v519 = vpop.f32.mrf.mxu0
    %v520 = vadd.f32 %v211, %v519
    %v521 = vpop.f32.mrf.mxu0
    %522 = vmatprep.mubr.f32.mxu0 %v145
    %523 = vmatmul.mubr.f32.gmra.mxu0 %v144
    %v524 = vpop.f32.mrf.mxu0
    %v525 = vadd.f32 %v211, %v524
    %v526 = vpop.f32.mrf.mxu0
    %527 = vmatprep.mubr.f32.mxu0 %v147
    %528 = vmatmul.mubr.f32.gmra.mxu0 %v146
    %v529 = vpop.f32.mrf.mxu0
    %v530 = vadd.f32 %v211, %v529
    %v531 = vpop.f32.mrf.mxu0
    %532 = vmatprep.mubr.f32.mxu0 %v149
    %533 = vmatmul.mubr.f32.gmra.mxu0 %v148
    %v534 = vpop.f32.mrf.mxu0
    %v535 = vadd.f32 %v211, %v534
    %v536 = vpop.f32.mrf.mxu0
    %537 = vmatprep.mubr.f32.mxu0 %v151
    %538 = vmatmul.mubr.f32.gmra.mxu0 %v150
    %v539 = vpop.f32.mrf.mxu0
    %v540 = vadd.f32 %v211, %v539
    %v541 = vpop.f32.mrf.mxu0
    %542 = vmatprep.mubr.f32.mxu0 %v153
    %543 = vmatmul.mubr.f32.gmra.mxu0 %v152
    %v544 = vpop.f32.mrf.mxu0
    %v545 = vadd.f32 %v211, %v544
    %v546 = vpop.f32.mrf.mxu0
    %547 = vmatprep.mubr.f32.mxu0 %v155
    %548 = vmatmul.mubr.f32.gmra.mxu0 %v154
    %v549 = vpop.f32.mrf.mxu0
    %v550 = vadd.f32 %v211, %v549
    %v551 = vpop.f32.mrf.mxu0
    %552 = vmatprep.mubr.f32.mxu0 %v157
    %553 = vmatmul.mubr.f32.gmra.mxu0 %v156
    %v554 = vpop.f32.mrf.mxu0
    %v555 = vadd.f32 %v211, %v554
    %v556 = vpop.f32.mrf.mxu0
    %557 = vmatprep.mubr.f32.mxu0 %v159
    %558 = vmatmul.mubr.f32.gmra.mxu0 %v158
    %v559 = vpop.f32.mrf.mxu0
    %v560 = vadd.f32 %v211, %v559
    %v561 = vpop.f32.mrf.mxu0
    %562 = vmatprep.mubr.f32.mxu0 %v161
    %563 = vmatmul.mubr.f32.gmra.mxu0 %v160
    %v564 = vpop.f32.mrf.mxu0
    %v565 = vadd.f32 %v211, %v564
    %v566 = vpop.f32.mrf.mxu0
    %567 = vmatprep.mubr.f32.mxu0 %v163
    %568 = vmatmul.mubr.f32.gmra.mxu0 %v162
    %v569 = vpop.f32.mrf.mxu0
    %v570 = vadd.f32 %v211, %v569
    %v571 = vpop.f32.mrf.mxu0
    %572 = vmatprep.mubr.f32.mxu0 %v165
    %573 = vmatmul.mubr.f32.gmra.mxu0 %v164
    %v574 = vpop.f32.mrf.mxu0
    %v575 = vadd.f32 %v211, %v574
    %v576 = vpop.f32.mrf.mxu0
    %577 = vmatprep.mubr.f32.mxu0 %v167
    %578 = vmatmul.mubr.f32.gmra.mxu0 %v166
    %v579 = vpop.f32.mrf.mxu0
    %v580 = vadd.f32 %v211, %v579
    %v581 = vpop.f32.mrf.mxu0
    %582 = vmatprep.mubr.f32.mxu0 %v169
    %583 = vmatmul.mubr.f32.gmra.mxu0 %v168
    %v584 = vpop.f32.mrf.mxu0
    %v585 = vadd.f32 %v211, %v584
    %v586 = vpop.f32.mrf.mxu0
    %587 = vmatprep.mubr.f32.mxu0 %v171
    %588 = vmatmul.mubr.f32.gmra.mxu0 %v170
    %v589 = vpop.f32.mrf.mxu0
    %v590 = vadd.f32 %v211, %v589
    %v591 = vpop.f32.mrf.mxu0
    %592 = vmatprep.mubr.f32.mxu0 %v173
    %593 = vmatmul.mubr.f32.gmra.mxu0 %v172
    %v594 = vpop.f32.mrf.mxu0
    %v595 = vadd.f32 %v211, %v594
    %v596 = vpop.f32.mrf.mxu0
    %597 = vdwg.mxu0
    %v598 = vmul.f32 %v280, %v280
    %v599 = vmul.f32 %v285, %v285
    %v600 = vmul.f32 %v290, %v290
    %v601 = vmul.f32 %v295, %v295
    %v602 = vmul.f32 %v300, %v300
    %v603 = vmul.f32 %v305, %v305
    %v604 = vmul.f32 %v310, %v310
    %v605 = vmul.f32 %v315, %v315
    %v606 = vmul.f32 %v320, %v320
    %v607 = vmul.f32 %v325, %v325
    %v608 = vmul.f32 %v330, %v330
    %v609 = vmul.f32 %v335, %v335
    %v610 = vmul.f32 %v340, %v340
    %v611 = vmul.f32 %v345, %v345
    %v612 = vmul.f32 %v350, %v350
    %v613 = vmul.f32 %v355, %v355
    %v614 = vmul.f32 %v360, %v360
    %v615 = vmul.f32 %v365, %v365
    %v616 = vmul.f32 %v370, %v370
    %v617 = vmul.f32 %v375, %v375
    %v618 = vmul.f32 %v380, %v380
    %v619 = vmul.f32 %v385, %v385
    %v620 = vmul.f32 %v390, %v390
    %v621 = vmul.f32 %v395, %v395
    %v622 = vmul.f32 %v400, %v400
    %v623 = vmul.f32 %v405, %v405
    %v624 = vmul.f32 %v410, %v410
    %v625 = vmul.f32 %v415, %v415
    %v626 = vmul.f32 %v420, %v420
    %v627 = vmul.f32 %v425, %v425
    %v628 = vmul.f32 %v430, %v430
    %v629 = vmul.f32 %v435, %v435
    %v630 = vmul.f32 %v440, %v440
    %v631 = vmul.f32 %v445, %v445
    %v632 = vmul.f32 %v450, %v450
    %v633 = vmul.f32 %v455, %v455
    %v634 = vmul.f32 %v460, %v460
    %v635 = vmul.f32 %v465, %v465
    %v636 = vmul.f32 %v470, %v470
    %v637 = vmul.f32 %v475, %v475
    %v638 = vmul.f32 %v480, %v480
    %v639 = vmul.f32 %v485, %v485
    %v640 = vmul.f32 %v490, %v490
    %v641 = vmul.f32 %v495, %v495
    %v642 = vmul.f32 %v500, %v500
    %v643 = vmul.f32 %v505, %v505
    %v644 = vmul.f32 %v510, %v510
    %v645 = vmul.f32 %v515, %v515
    %v646 = vmul.f32 %v520, %v520
    %v647 = vmul.f32 %v525, %v525
    %v648 = vmul.f32 %v530, %v530
    %v649 = vmul.f32 %v535, %v535
    %v650 = vmul.f32 %v540, %v540
    %v651 = vmul.f32 %v545, %v545
    %v652 = vmul.f32 %v550, %v550
    %v653 = vmul.f32 %v555, %v555
    %v654 = vmul.f32 %v560, %v560
    %v655 = vmul.f32 %v565, %v565
    %v656 = vmul.f32 %v570, %v570
    %v657 = vmul.f32 %v575, %v575
    %v658 = vmul.f32 %v580, %v580
    %v659 = vmul.f32 %v585, %v585
    %v660 = vmul.f32 %v590, %v590
    %v661 = vmul.f32 %v595, %v595
    %662 = vadd.xlane.f32.xlu0 %v598
    %v663 = vpop.xlane.xlu0 %662
    %664 = vadd.xlane.f32.xlu0 %v599
    %v665 = vpop.xlane.xlu0 %664
    %666 = vadd.xlane.f32.xlu0 %v600
    %v667 = vpop.xlane.xlu0 %666
    %668 = vadd.xlane.f32.xlu0 %v601
    %v669 = vpop.xlane.xlu0 %668
    %670 = vadd.xlane.f32.xlu0 %v602
    %v671 = vpop.xlane.xlu0 %670
    %672 = vadd.xlane.f32.xlu0 %v603
    %v673 = vpop.xlane.xlu0 %672
    %674 = vadd.xlane.f32.xlu0 %v604
    %v675 = vpop.xlane.xlu0 %674
    %676 = vadd.xlane.f32.xlu0 %v605
    %v677 = vpop.xlane.xlu0 %676
    %678 = vadd.xlane.f32.xlu0 %v606
    %v679 = vpop.xlane.xlu0 %678
    %680 = vadd.xlane.f32.xlu0 %v607
    %v681 = vpop.xlane.xlu0 %680
    %682 = vadd.xlane.f32.xlu0 %v608
    %v683 = vpop.xlane.xlu0 %682
    %684 = vadd.xlane.f32.xlu0 %v609
    %v685 = vpop.xlane.xlu0 %684
    %686 = vadd.xlane.f32.xlu0 %v610
    %v687 = vpop.xlane.xlu0 %686
    %688 = vadd.xlane.f32.xlu0 %v611
    %v689 = vpop.xlane.xlu0 %688
    %690 = vadd.xlane.f32.xlu0 %v612
    %v691 = vpop.xlane.xlu0 %690
    %692 = vadd.xlane.f32.xlu0 %v613
    %v693 = vpop.xlane.xlu0 %692
    %694 = vadd.xlane.f32.xlu0 %v614
    %v695 = vpop.xlane.xlu0 %694
    %696 = vadd.xlane.f32.xlu0 %v615
    %v697 = vpop.xlane.xlu0 %696
    %698 = vadd.xlane.f32.xlu0 %v616
    %v699 = vpop.xlane.xlu0 %698
    %700 = vadd.xlane.f32.xlu0 %v617
    %v701 = vpop.xlane.xlu0 %700
    %702 = vadd.xlane.f32.xlu0 %v618
    %v703 = vpop.xlane.xlu0 %702
    %704 = vadd.xlane.f32.xlu0 %v619
    %v705 = vpop.xlane.xlu0 %704
    %706 = vadd.xlane.f32.xlu0 %v620
    %v707 = vpop.xlane.xlu0 %706
    %708 = vadd.xlane.f32.xlu0 %v621
    %v709 = vpop.xlane.xlu0 %708
    %710 = vadd.xlane.f32.xlu0 %v622
    %v711 = vpop.xlane.xlu0 %710
    %712 = vadd.xlane.f32.xlu0 %v623
    %v713 = vpop.xlane.xlu0 %712
    %714 = vadd.xlane.f32.xlu0 %v624
    %v715 = vpop.xlane.xlu0 %714
    %716 = vadd.xlane.f32.xlu0 %v625
    %v717 = vpop.xlane.xlu0 %716
    %718 = vadd.xlane.f32.xlu0 %v626
    %v719 = vpop.xlane.xlu0 %718
    %720 = vadd.xlane.f32.xlu0 %v627
    %v721 = vpop.xlane.xlu0 %720
    %722 = vadd.xlane.f32.xlu0 %v628
    %v723 = vpop.xlane.xlu0 %722
    %724 = vadd.xlane.f32.xlu0 %v629
    %v725 = vpop.xlane.xlu0 %724
    %726 = vadd.xlane.f32.xlu0 %v630
    %v727 = vpop.xlane.xlu0 %726
    %728 = vadd.xlane.f32.xlu0 %v631
    %v729 = vpop.xlane.xlu0 %728
    %730 = vadd.xlane.f32.xlu0 %v632
    %v731 = vpop.xlane.xlu0 %730
    %732 = vadd.xlane.f32.xlu0 %v633
    %v733 = vpop.xlane.xlu0 %732
    %734 = vadd.xlane.f32.xlu0 %v634
    %v735 = vpop.xlane.xlu0 %734
    %736 = vadd.xlane.f32.xlu0 %v635
    %v737 = vpop.xlane.xlu0 %736
    %738 = vadd.xlane.f32.xlu0 %v636
    %v739 = vpop.xlane.xlu0 %738
    %740 = vadd.xlane.f32.xlu0 %v637
    %v741 = vpop.xlane.xlu0 %740
    %742 = vadd.xlane.f32.xlu0 %v638
    %v743 = vpop.xlane.xlu0 %742
    %744 = vadd.xlane.f32.xlu0 %v639
    %v745 = vpop.xlane.xlu0 %744
    %746 = vadd.xlane.f32.xlu0 %v640
    %v747 = vpop.xlane.xlu0 %746
    %748 = vadd.xlane.f32.xlu0 %v641
    %v749 = vpop.xlane.xlu0 %748
    %750 = vadd.xlane.f32.xlu0 %v642
    %v751 = vpop.xlane.xlu0 %750
    %752 = vadd.xlane.f32.xlu0 %v643
    %v753 = vpop.xlane.xlu0 %752
    %754 = vadd.xlane.f32.xlu0 %v644
    %v755 = vpop.xlane.xlu0 %754
    %756 = vadd.xlane.f32.xlu0 %v645
    %v757 = vpop.xlane.xlu0 %756
    %758 = vadd.xlane.f32.xlu0 %v646
    %v759 = vpop.xlane.xlu0 %758
    %760 = vadd.xlane.f32.xlu0 %v647
    %v761 = vpop.xlane.xlu0 %760
    %762 = vadd.xlane.f32.xlu0 %v648
    %v763 = vpop.xlane.xlu0 %762
    %764 = vadd.xlane.f32.xlu0 %v649
    %v765 = vpop.xlane.xlu0 %764
    %766 = vadd.xlane.f32.xlu0 %v650
    %v767 = vpop.xlane.xlu0 %766
    %768 = vadd.xlane.f32.xlu0 %v651
    %v769 = vpop.xlane.xlu0 %768
    %770 = vadd.xlane.f32.xlu0 %v652
    %v771 = vpop.xlane.xlu0 %770
    %772 = vadd.xlane.f32.xlu0 %v653
    %v773 = vpop.xlane.xlu0 %772
    %774 = vadd.xlane.f32.xlu0 %v654
    %v775 = vpop.xlane.xlu0 %774
    %776 = vadd.xlane.f32.xlu0 %v655
    %v777 = vpop.xlane.xlu0 %776
    %778 = vadd.xlane.f32.xlu0 %v656
    %v779 = vpop.xlane.xlu0 %778
    %780 = vadd.xlane.f32.xlu0 %v657
    %v781 = vpop.xlane.xlu0 %780
    %782 = vadd.xlane.f32.xlu0 %v658
    %v783 = vpop.xlane.xlu0 %782
    %784 = vadd.xlane.f32.xlu0 %v659
    %v785 = vpop.xlane.xlu0 %784
    %786 = vadd.xlane.f32.xlu0 %v660
    %v787 = vpop.xlane.xlu0 %786
    %788 = vadd.xlane.f32.xlu0 %v661
    %v789 = vpop.xlane.xlu0 %788
    %v790 = vadd.f32 %v663, 1e-06
    %v791 = vadd.f32 %v665, 1e-06
    %v792 = vadd.f32 %v667, 1e-06
    %v793 = vadd.f32 %v669, 1e-06
    %v794 = vadd.f32 %v671, 1e-06
    %v795 = vadd.f32 %v673, 1e-06
    %v796 = vadd.f32 %v675, 1e-06
    %v797 = vadd.f32 %v677, 1e-06
    %v798 = vadd.f32 %v679, 1e-06
    %v799 = vadd.f32 %v681, 1e-06
    %v800 = vadd.f32 %v683, 1e-06
    %v801 = vadd.f32 %v685, 1e-06
    %v802 = vadd.f32 %v687, 1e-06
    %v803 = vadd.f32 %v689, 1e-06
    %v804 = vadd.f32 %v691, 1e-06
    %v805 = vadd.f32 %v693, 1e-06
    %v806 = vadd.f32 %v695, 1e-06
    %v807 = vadd.f32 %v697, 1e-06
    %v808 = vadd.f32 %v699, 1e-06
    %v809 = vadd.f32 %v701, 1e-06
    %v810 = vadd.f32 %v703, 1e-06
    %v811 = vadd.f32 %v705, 1e-06
    %v812 = vadd.f32 %v707, 1e-06
    %v813 = vadd.f32 %v709, 1e-06
    %v814 = vadd.f32 %v711, 1e-06
    %v815 = vadd.f32 %v713, 1e-06
    %v816 = vadd.f32 %v715, 1e-06
    %v817 = vadd.f32 %v717, 1e-06
    %v818 = vadd.f32 %v719, 1e-06
    %v819 = vadd.f32 %v721, 1e-06
    %v820 = vadd.f32 %v723, 1e-06
    %v821 = vadd.f32 %v725, 1e-06
    %v822 = vadd.f32 %v727, 1e-06
    %v823 = vadd.f32 %v729, 1e-06
    %v824 = vadd.f32 %v731, 1e-06
    %v825 = vadd.f32 %v733, 1e-06
    %v826 = vadd.f32 %v735, 1e-06
    %v827 = vadd.f32 %v737, 1e-06
    %v828 = vadd.f32 %v739, 1e-06
    %v829 = vadd.f32 %v741, 1e-06
    %v830 = vadd.f32 %v743, 1e-06
    %v831 = vadd.f32 %v745, 1e-06
    %v832 = vadd.f32 %v747, 1e-06
    %v833 = vadd.f32 %v749, 1e-06
    %v834 = vadd.f32 %v751, 1e-06
    %v835 = vadd.f32 %v753, 1e-06
    %v836 = vadd.f32 %v755, 1e-06
    %v837 = vadd.f32 %v757, 1e-06
    %v838 = vadd.f32 %v759, 1e-06
    %v839 = vadd.f32 %v761, 1e-06
    %v840 = vadd.f32 %v763, 1e-06
    %v841 = vadd.f32 %v765, 1e-06
    %v842 = vadd.f32 %v767, 1e-06
    %v843 = vadd.f32 %v769, 1e-06
    %v844 = vadd.f32 %v771, 1e-06
    %v845 = vadd.f32 %v773, 1e-06
    %v846 = vadd.f32 %v775, 1e-06
    %v847 = vadd.f32 %v777, 1e-06
    %v848 = vadd.f32 %v779, 1e-06
    %v849 = vadd.f32 %v781, 1e-06
    %v850 = vadd.f32 %v783, 1e-06
    %v851 = vadd.f32 %v785, 1e-06
    %v852 = vadd.f32 %v787, 1e-06
    %v853 = vadd.f32 %v789, 1e-06
    %v854 = vrsqrt.pop %v790
    %v855 = vrsqrt.pop %v791
    %v856 = vrsqrt.pop %v792
    %v857 = vrsqrt.pop %v793
    %v858 = vrsqrt.pop %v794
    %v859 = vrsqrt.pop %v795
    %v860 = vrsqrt.pop %v796
    %v861 = vrsqrt.pop %v797
    %v862 = vrsqrt.pop %v798
    %v863 = vrsqrt.pop %v799
    %v864 = vrsqrt.pop %v800
    %v865 = vrsqrt.pop %v801
    %v866 = vrsqrt.pop %v802
    %v867 = vrsqrt.pop %v803
    %v868 = vrsqrt.pop %v804
    %v869 = vrsqrt.pop %v805
    %v870 = vrsqrt.pop %v806
    %v871 = vrsqrt.pop %v807
    %v872 = vrsqrt.pop %v808
    %v873 = vrsqrt.pop %v809
    %v874 = vrsqrt.pop %v810
    %v875 = vrsqrt.pop %v811
    %v876 = vrsqrt.pop %v812
    %v877 = vrsqrt.pop %v813
    %v878 = vrsqrt.pop %v814
    %v879 = vrsqrt.pop %v815
    %v880 = vrsqrt.pop %v816
    %v881 = vrsqrt.pop %v817
    %v882 = vrsqrt.pop %v818
    %v883 = vrsqrt.pop %v819
    %v884 = vrsqrt.pop %v820
    %v885 = vrsqrt.pop %v821
    %v886 = vrsqrt.pop %v822
    %v887 = vrsqrt.pop %v823
    %v888 = vrsqrt.pop %v824
    %v889 = vrsqrt.pop %v825
    %v890 = vrsqrt.pop %v826
    %v891 = vrsqrt.pop %v827
    %v892 = vrsqrt.pop %v828
    %v893 = vrsqrt.pop %v829
    %v894 = vrsqrt.pop %v830
    %v895 = vrsqrt.pop %v831
    %v896 = vrsqrt.pop %v832
    %v897 = vrsqrt.pop %v833
    %v898 = vrsqrt.pop %v834
    %v899 = vrsqrt.pop %v835
    %v900 = vrsqrt.pop %v836
    %v901 = vrsqrt.pop %v837
    %v902 = vrsqrt.pop %v838
    %v903 = vrsqrt.pop %v839
    %v904 = vrsqrt.pop %v840
    %v905 = vrsqrt.pop %v841
    %v906 = vrsqrt.pop %v842
    %v907 = vrsqrt.pop %v843
    %v908 = vrsqrt.pop %v844
    %v909 = vrsqrt.pop %v845
    %v910 = vrsqrt.pop %v846
    %v911 = vrsqrt.pop %v847
    %v912 = vrsqrt.pop %v848
    %v913 = vrsqrt.pop %v849
    %v914 = vrsqrt.pop %v850
    %v915 = vrsqrt.pop %v851
    %v916 = vrsqrt.pop %v852
    %v917 = vrsqrt.pop %v853
    %v918 = vmul.f32 %v280, %v854
    %v919 = vmul.f32 %v285, %v855
    %v920 = vmul.f32 %v290, %v856
    %v921 = vmul.f32 %v295, %v857
    %v922 = vmul.f32 %v300, %v858
    %v923 = vmul.f32 %v305, %v859
    %v924 = vmul.f32 %v310, %v860
    %v925 = vmul.f32 %v315, %v861
    %v926 = vmul.f32 %v320, %v862
    %v927 = vmul.f32 %v325, %v863
    %v928 = vmul.f32 %v330, %v864
    %v929 = vmul.f32 %v335, %v865
    %v930 = vmul.f32 %v340, %v866
    %v931 = vmul.f32 %v345, %v867
    %v932 = vmul.f32 %v350, %v868
    %v933 = vmul.f32 %v355, %v869
    %v934 = vmul.f32 %v360, %v870
    %v935 = vmul.f32 %v365, %v871
    %v936 = vmul.f32 %v370, %v872
    %v937 = vmul.f32 %v375, %v873
    %v938 = vmul.f32 %v380, %v874
    %v939 = vmul.f32 %v385, %v875
    %v940 = vmul.f32 %v390, %v876
    %v941 = vmul.f32 %v395, %v877
    %v942 = vmul.f32 %v400, %v878
    %v943 = vmul.f32 %v405, %v879
    %v944 = vmul.f32 %v410, %v880
    %v945 = vmul.f32 %v415, %v881
    %v946 = vmul.f32 %v420, %v882
    %v947 = vmul.f32 %v425, %v883
    %v948 = vmul.f32 %v430, %v884
    %v949 = vmul.f32 %v435, %v885
    %v950 = vmul.f32 %v440, %v886
    %v951 = vmul.f32 %v445, %v887
    %v952 = vmul.f32 %v450, %v888
    %v953 = vmul.f32 %v455, %v889
    %v954 = vmul.f32 %v460, %v890
    %v955 = vmul.f32 %v465, %v891
    %v956 = vmul.f32 %v470, %v892
    %v957 = vmul.f32 %v475, %v893
    %v958 = vmul.f32 %v480, %v894
    %v959 = vmul.f32 %v485, %v895
    %v960 = vmul.f32 %v490, %v896
    %v961 = vmul.f32 %v495, %v897
    %v962 = vmul.f32 %v500, %v898
    %v963 = vmul.f32 %v505, %v899
    %v964 = vmul.f32 %v510, %v900
    %v965 = vmul.f32 %v515, %v901
    %v966 = vmul.f32 %v520, %v902
    %v967 = vmul.f32 %v525, %v903
    %v968 = vmul.f32 %v530, %v904
    %v969 = vmul.f32 %v535, %v905
    %v970 = vmul.f32 %v540, %v906
    %v971 = vmul.f32 %v545, %v907
    %v972 = vmul.f32 %v550, %v908
    %v973 = vmul.f32 %v555, %v909
    %v974 = vmul.f32 %v560, %v910
    %v975 = vmul.f32 %v565, %v911
    %v976 = vmul.f32 %v570, %v912
    %v977 = vmul.f32 %v575, %v913
    %v978 = vmul.f32 %v580, %v914
    %v979 = vmul.f32 %v585, %v915
    %v980 = vmul.f32 %v590, %v916
    %v981 = vmul.f32 %v595, %v917
    %982 = vst [vmem:[#allocation7] sm:$0xff] %v918
    %983 = vst [vmem:[#allocation7 + $0x8] sm:$0xff] %v919
    %984 = vst [vmem:[#allocation7 + $0x10] sm:$0xff] %v920
    %985 = vst [vmem:[#allocation7 + $0x18] sm:$0xff] %v921
    %986 = vst [vmem:[#allocation7 + $0x20] sm:$0xff] %v922
    %987 = vst [vmem:[#allocation7 + $0x28] sm:$0xff] %v923
    %988 = vst [vmem:[#allocation7 + $0x30] sm:$0xff] %v924
    %989 = vst [vmem:[#allocation7 + $0x38] sm:$0xff] %v925
    %990 = vst [vmem:[#allocation7 + $0x40] sm:$0xff] %v926
    %991 = vst [vmem:[#allocation7 + $0x48] sm:$0xff] %v927
    %992 = vst [vmem:[#allocation7 + $0x50] sm:$0xff] %v928
    %993 = vst [vmem:[#allocation7 + $0x58] sm:$0xff] %v929
    %994 = vst [vmem:[#allocation7 + $0x60] sm:$0xff] %v930
    %995 = vst [vmem:[#allocation7 + $0x68] sm:$0xff] %v931
    %996 = vst [vmem:[#allocation7 + $0x70] sm:$0xff] %v932
    %997 = vst [vmem:[#allocation7 + $0x78] sm:$0xff] %v933
    %998 = vst [vmem:[#allocation7 + $0x80] sm:$0xff] %v934
    %999 = vst [vmem:[#allocation7 + $0x88] sm:$0xff] %v935
    %1000 = vst [vmem:[#allocation7 + $0x90] sm:$0xff] %v936
    %1001 = vst [vmem:[#allocation7 + $0x98] sm:$0xff] %v937
    %1002 = vst [vmem:[#allocation7 + $0xa0] sm:$0xff] %v938
    %1003 = vst [vmem:[#allocation7 + $0xa8] sm:$0xff] %v939
    %1004 = vst [vmem:[#allocation7 + $0xb0] sm:$0xff] %v940
    %1005 = vst [vmem:[#allocation7 + $0xb8] sm:$0xff] %v941
    %1006 = vst [vmem:[#allocation7 + $0xc0] sm:$0xff] %v942
    %1007 = vst [vmem:[#allocation7 + $0xc8] sm:$0xff] %v943
    %1008 = vst [vmem:[#allocation7 + $0xd0] sm:$0xff] %v944
    %1009 = vst [vmem:[#allocation7 + $0xd8] sm:$0xff] %v945
    %1010 = vst [vmem:[#allocation7 + $0xe0] sm:$0xff] %v946
    %1011 = vst [vmem:[#allocation7 + $0xe8] sm:$0xff] %v947
    %1012 = vst [vmem:[#allocation7 + $0xf0] sm:$0xff] %v948
    %1013 = vst [vmem:[#allocation7 + $0xf8] sm:$0xff] %v949
    %1014 = vst [vmem:[#allocation7 + $0x100] sm:$0xff] %v950
    %1015 = vst [vmem:[#allocation7 + $0x108] sm:$0xff] %v951
    %1016 = vst [vmem:[#allocation7 + $0x110] sm:$0xff] %v952
    %1017 = vst [vmem:[#allocation7 + $0x118] sm:$0xff] %v953
    %1018 = vst [vmem:[#allocation7 + $0x120] sm:$0xff] %v954
    %1019 = vst [vmem:[#allocation7 + $0x128] sm:$0xff] %v955
    %1020 = vst [vmem:[#allocation7 + $0x130] sm:$0xff] %v956
    %1021 = vst [vmem:[#allocation7 + $0x138] sm:$0xff] %v957
    %1022 = vst [vmem:[#allocation7 + $0x140] sm:$0xff] %v958
    %1023 = vst [vmem:[#allocation7 + $0x148] sm:$0xff] %v959
    %1024 = vst [vmem:[#allocation7 + $0x150] sm:$0xff] %v960
    %1025 = vst [vmem:[#allocation7 + $0x158] sm:$0xff] %v961
    %1026 = vst [vmem:[#allocation7 + $0x160] sm:$0xff] %v962
    %1027 = vst [vmem:[#allocation7 + $0x168] sm:$0xff] %v963
    %1028 = vst [vmem:[#allocation7 + $0x170] sm:$0xff] %v964
    %1029 = vst [vmem:[#allocation7 + $0x178] sm:$0xff] %v965
    %1030 = vst [vmem:[#allocation7 + $0x180] sm:$0xff] %v966
    %1031 = vst [vmem:[#allocation7 + $0x188] sm:$0xff] %v967
    %1032 = vst [vmem:[#allocation7 + $0x190] sm:$0xff] %v968
    %1033 = vst [vmem:[#allocation7 + $0x198] sm:$0xff] %v969
    %1034 = vst [vmem:[#allocation7 + $0x1a0] sm:$0xff] %v970
    %1035 = vst [vmem:[#allocation7 + $0x1a8] sm:$0xff] %v971
    %1036 = vst [vmem:[#allocation7 + $0x1b0] sm:$0xff] %v972
    %1037 = vst [vmem:[#allocation7 + $0x1b8] sm:$0xff] %v973
    %1038 = vst [vmem:[#allocation7 + $0x1c0] sm:$0xff] %v974
    %1039 = vst [vmem:[#allocation7 + $0x1c8] sm:$0xff] %v975
    %1040 = vst [vmem:[#allocation7 + $0x1d0] sm:$0xff] %v976
    %1041 = vst [vmem:[#allocation7 + $0x1d8] sm:$0xff] %v977
    %1042 = vst [vmem:[#allocation7 + $0x1e0] sm:$0xff] %v978
    %1043 = vst [vmem:[#allocation7 + $0x1e8] sm:$0xff] %v979
    %1044 = vst [vmem:[#allocation7 + $0x1f0] sm:$0xff] %v980
    %1045 = vst [vmem:[#allocation7 + $0x1f8] sm:$0xff] %v981
    %v1046 = vpack.c.bf16 %v48, %v46
    %v1047 = vpack.c.bf16 %v49, %v47
    %v1048 = vpack.c.bf16 %v285, %v280
    %v1049 = vpack.c.bf16 %v52, %v50
    %v1050 = vpack.c.bf16 %v53, %v51
    %v1051 = vpack.c.bf16 %v295, %v290
    %v1052 = vpack.c.bf16 %v56, %v54
    %v1053 = vpack.c.bf16 %v57, %v55
    %v1054 = vpack.c.bf16 %v305, %v300
    %v1055 = vpack.c.bf16 %v60, %v58
    %v1056 = vpack.c.bf16 %v61, %v59
    %v1057 = vpack.c.bf16 %v315, %v310
    %v1058 = vpack.c.bf16 %v64, %v62
    %v1059 = vpack.c.bf16 %v65, %v63
    %v1060 = vpack.c.bf16 %v325, %v320
    %v1061 = vpack.c.bf16 %v68, %v66
    %v1062 = vpack.c.bf16 %v69, %v67
    %v1063 = vpack.c.bf16 %v335, %v330
    %v1064 = vpack.c.bf16 %v72, %v70
    %v1065 = vpack.c.bf16 %v73, %v71
    %v1066 = vpack.c.bf16 %v345, %v340
    %v1067 = vpack.c.bf16 %v76, %v74
    %v1068 = vpack.c.bf16 %v77, %v75
    %v1069 = vpack.c.bf16 %v355, %v350
    %v1070 = vpack.c.bf16 %v80, %v78
    %v1071 = vpack.c.bf16 %v81, %v79
    %v1072 = vpack.c.bf16 %v365, %v360
    %v1073 = vpack.c.bf16 %v84, %v82
    %v1074 = vpack.c.bf16 %v85, %v83
    %v1075 = vpack.c.bf16 %v375, %v370
    %v1076 = vpack.c.bf16 %v88, %v86
    %v1077 = vpack.c.bf16 %v89, %v87
    %v1078 = vpack.c.bf16 %v385, %v380
    %v1079 = vpack.c.bf16 %v92, %v90
    %v1080 = vpack.c.bf16 %v93, %v91
    %v1081 = vpack.c.bf16 %v395, %v390
    %v1082 = vpack.c.bf16 %v96, %v94
    %v1083 = vpack.c.bf16 %v97, %v95
    %v1084 = vpack.c.bf16 %v405, %v400
    %v1085 = vpack.c.bf16 %v100, %v98
    %v1086 = vpack.c.bf16 %v101, %v99
    %v1087 = vpack.c.bf16 %v415, %v410
    %v1088 = vpack.c.bf16 %v104, %v102
    %v1089 = vpack.c.bf16 %v105, %v103
    %v1090 = vpack.c.bf16 %v425, %v420
    %v1091 = vpack.c.bf16 %v108, %v106
    %v1092 = vpack.c.bf16 %v109, %v107
    %v1093 = vpack.c.bf16 %v435, %v430
    %v1094 = vpack.c.bf16 %v112, %v110
    %v1095 = vpack.c.bf16 %v113, %v111
    %v1096 = vpack.c.bf16 %v445, %v440
    %v1097 = vpack.c.bf16 %v116, %v114
    %v1098 = vpack.c.bf16 %v117, %v115
    %v1099 = vpack.c.bf16 %v455, %v450
    %v1100 = vpack.c.bf16 %v120, %v118
    %v1101 = vpack.c.bf16 %v121, %v119
    %v1102 = vpack.c.bf16 %v465, %v460
    %v1103 = vpack.c.bf16 %v124, %v122
    %v1104 = vpack.c.bf16 %v125, %v123
    %v1105 = vpack.c.bf16 %v475, %v470
    %v1106 = vpack.c.bf16 %v128, %v126
    %v1107 = vpack.c.bf16 %v129, %v127
    %v1108 = vpack.c.bf16 %v485, %v480
    %v1109 = vpack.c.bf16 %v132, %v130
    %v1110 = vpack.c.bf16 %v133, %v131
    %v1111 = vpack.c.bf16 %v495, %v490
    %v1112 = vpack.c.bf16 %v136, %v134
    %v1113 = vpack.c.bf16 %v137, %v135
    %v1114 = vpack.c.bf16 %v505, %v500
    %v1115 = vpack.c.bf16 %v140, %v138
    %v1116 = vpack.c.bf16 %v141, %v139
    %v1117 = vpack.c.bf16 %v515, %v510
    %v1118 = vpack.c.bf16 %v144, %v142
    %v1119 = vpack.c.bf16 %v145, %v143
    %v1120 = vpack.c.bf16 %v525, %v520
    %v1121 = vpack.c.bf16 %v148, %v146
    %v1122 = vpack.c.bf16 %v149, %v147
    %v1123 = vpack.c.bf16 %v535, %v530
    %v1124 = vpack.c.bf16 %v152, %v150
    %v1125 = vpack.c.bf16 %v153, %v151
    %v1126 = vpack.c.bf16 %v545, %v540
    %v1127 = vpack.c.bf16 %v156, %v154
    %v1128 = vpack.c.bf16 %v157, %v155
    %v1129 = vpack.c.bf16 %v555, %v550
    %v1130 = vpack.c.bf16 %v160, %v158
    %v1131 = vpack.c.bf16 %v161, %v159
    %v1132 = vpack.c.bf16 %v565, %v560
    %v1133 = vpack.c.bf16 %v164, %v162
    %v1134 = vpack.c.bf16 %v165, %v163
    %v1135 = vpack.c.bf16 %v575, %v570
    %v1136 = vpack.c.bf16 %v168, %v166
    %v1137 = vpack.c.bf16 %v169, %v167
    %v1138 = vpack.c.bf16 %v585, %v580
    %v1139 = vpack.c.bf16 %v172, %v170
    %v1140 = vpack.c.bf16 %v173, %v171
    %v1141 = vpack.c.bf16 %v595, %v590
    %v1238 = vunpack.c.l.b16 %v1046
    %v1239 = vunpack.c.l.b16 %v1047
    %v1240 = vunpack.c.l.b16 %v1048
    %v1241 = vunpack.c.h.b16 %v1046
    %v1242 = vunpack.c.h.b16 %v1047
    %v1243 = vunpack.c.h.b16 %v1048
    %v1244 = vunpack.c.l.b16 %v1049
    %v1245 = vunpack.c.l.b16 %v1050
    %v1246 = vunpack.c.l.b16 %v1051
    %v1247 = vunpack.c.h.b16 %v1049
    %v1248 = vunpack.c.h.b16 %v1050
    %v1249 = vunpack.c.h.b16 %v1051
    %v1250 = vunpack.c.l.b16 %v1052
    %v1251 = vunpack.c.l.b16 %v1053
    %v1252 = vunpack.c.l.b16 %v1054
    %v1253 = vunpack.c.h.b16 %v1052
    %v1254 = vunpack.c.h.b16 %v1053
    %v1255 = vunpack.c.h.b16 %v1054
    %v1256 = vunpack.c.l.b16 %v1055
    %v1257 = vunpack.c.l.b16 %v1056
    %v1258 = vunpack.c.l.b16 %v1057
    %v1259 = vunpack.c.h.b16 %v1055
    %v1260 = vunpack.c.h.b16 %v1056
    %v1261 = vunpack.c.h.b16 %v1057
    %v1262 = vunpack.c.l.b16 %v1058
    %v1263 = vunpack.c.l.b16 %v1059
    %v1264 = vunpack.c.l.b16 %v1060
    %v1265 = vunpack.c.h.b16 %v1058
    %v1266 = vunpack.c.h.b16 %v1059
    %v1267 = vunpack.c.h.b16 %v1060
    %v1268 = vunpack.c.l.b16 %v1061
    %v1269 = vunpack.c.l.b16 %v1062
    %v1270 = vunpack.c.l.b16 %v1063
    %v1271 = vunpack.c.h.b16 %v1061
    %v1272 = vunpack.c.h.b16 %v1062
    %v1273 = vunpack.c.h.b16 %v1063
    %v1274 = vunpack.c.l.b16 %v1064
    %v1275 = vunpack.c.l.b16 %v1065
    %v1276 = vunpack.c.l.b16 %v1066
    %v1277 = vunpack.c.h.b16 %v1064
    %v1278 = vunpack.c.h.b16 %v1065
    %v1279 = vunpack.c.h.b16 %v1066
    %v1280 = vunpack.c.l.b16 %v1067
    %v1281 = vunpack.c.l.b16 %v1068
    %v1282 = vunpack.c.l.b16 %v1069
    %v1283 = vunpack.c.h.b16 %v1067
    %v1284 = vunpack.c.h.b16 %v1068
    %v1285 = vunpack.c.h.b16 %v1069
    %v1286 = vunpack.c.l.b16 %v1070
    %v1287 = vunpack.c.l.b16 %v1071
    %v1288 = vunpack.c.l.b16 %v1072
    %v1289 = vunpack.c.h.b16 %v1070
    %v1290 = vunpack.c.h.b16 %v1071
    %v1291 = vunpack.c.h.b16 %v1072
    %v1292 = vunpack.c.l.b16 %v1073
    %v1293 = vunpack.c.l.b16 %v1074
    %v1294 = vunpack.c.l.b16 %v1075
    %v1295 = vunpack.c.h.b16 %v1073
    %v1296 = vunpack.c.h.b16 %v1074
    %v1297 = vunpack.c.h.b16 %v1075
    %v1298 = vunpack.c.l.b16 %v1076
    %v1299 = vunpack.c.l.b16 %v1077
    %v1300 = vunpack.c.l.b16 %v1078
    %v1301 = vunpack.c.h.b16 %v1076
    %v1302 = vunpack.c.h.b16 %v1077
    %v1303 = vunpack.c.h.b16 %v1078
    %v1304 = vunpack.c.l.b16 %v1079
    %v1305 = vunpack.c.l.b16 %v1080
    %v1306 = vunpack.c.l.b16 %v1081
    %v1307 = vunpack.c.h.b16 %v1079
    %v1308 = vunpack.c.h.b16 %v1080
    %v1309 = vunpack.c.h.b16 %v1081
    %v1310 = vunpack.c.l.b16 %v1082
    %v1311 = vunpack.c.l.b16 %v1083
    %v1312 = vunpack.c.l.b16 %v1084
    %v1313 = vunpack.c.h.b16 %v1082
    %v1314 = vunpack.c.h.b16 %v1083
    %v1315 = vunpack.c.h.b16 %v1084
    %v1316 = vunpack.c.l.b16 %v1085
    %v1317 = vunpack.c.l.b16 %v1086
    %v1318 = vunpack.c.l.b16 %v1087
    %v1319 = vunpack.c.h.b16 %v1085
    %v1320 = vunpack.c.h.b16 %v1086
    %v1321 = vunpack.c.h.b16 %v1087
    %v1322 = vunpack.c.l.b16 %v1088
    %v1323 = vunpack.c.l.b16 %v1089
    %v1324 = vunpack.c.l.b16 %v1090
    %v1325 = vunpack.c.h.b16 %v1088
    %v1326 = vunpack.c.h.b16 %v1089
    %v1327 = vunpack.c.h.b16 %v1090
    %v1328 = vunpack.c.l.b16 %v1091
    %v1329 = vunpack.c.l.b16 %v1092
    %v1330 = vunpack.c.l.b16 %v1093
    %v1331 = vunpack.c.h.b16 %v1091
    %v1332 = vunpack.c.h.b16 %v1092
    %v1333 = vunpack.c.h.b16 %v1093
    %v1334 = vunpack.c.l.b16 %v1094
    %v1335 = vunpack.c.l.b16 %v1095
    %v1336 = vunpack.c.l.b16 %v1096
    %v1337 = vunpack.c.h.b16 %v1094
    %v1338 = vunpack.c.h.b16 %v1095
    %v1339 = vunpack.c.h.b16 %v1096
    %v1340 = vunpack.c.l.b16 %v1097
    %v1341 = vunpack.c.l.b16 %v1098
    %v1342 = vunpack.c.l.b16 %v1099
    %v1343 = vunpack.c.h.b16 %v1097
    %v1344 = vunpack.c.h.b16 %v1098
    %v1345 = vunpack.c.h.b16 %v1099
    %v1346 = vunpack.c.l.b16 %v1100
    %v1347 = vunpack.c.l.b16 %v1101
    %v1348 = vunpack.c.l.b16 %v1102
    %v1349 = vunpack.c.h.b16 %v1100
    %v1350 = vunpack.c.h.b16 %v1101
    %v1351 = vunpack.c.h.b16 %v1102
    %v1352 = vunpack.c.l.b16 %v1103
    %v1353 = vunpack.c.l.b16 %v1104
    %v1354 = vunpack.c.l.b16 %v1105
    %v1355 = vunpack.c.h.b16 %v1103
    %v1356 = vunpack.c.h.b16 %v1104
    %v1357 = vunpack.c.h.b16 %v1105
    %v1358 = vunpack.c.l.b16 %v1106
    %v1359 = vunpack.c.l.b16 %v1107
    %v1360 = vunpack.c.l.b16 %v1108
    %v1361 = vunpack.c.h.b16 %v1106
    %v1362 = vunpack.c.h.b16 %v1107
    %v1363 = vunpack.c.h.b16 %v1108
    %v1364 = vunpack.c.l.b16 %v1109
    %v1365 = vunpack.c.l.b16 %v1110
    %v1366 = vunpack.c.l.b16 %v1111
    %v1367 = vunpack.c.h.b16 %v1109
    %v1368 = vunpack.c.h.b16 %v1110
    %v1369 = vunpack.c.h.b16 %v1111
    %v1370 = vunpack.c.l.b16 %v1112
    %v1371 = vunpack.c.l.b16 %v1113
    %v1372 = vunpack.c.l.b16 %v1114
    %v1373 = vunpack.c.h.b16 %v1112
    %v1374 = vunpack.c.h.b16 %v1113
    %v1375 = vunpack.c.h.b16 %v1114
    %v1376 = vunpack.c.l.b16 %v1115
    %v1377 = vunpack.c.l.b16 %v1116
    %v1378 = vunpack.c.l.b16 %v1117
    %v1379 = vunpack.c.h.b16 %v1115
    %v1380 = vunpack.c.h.b16 %v1116
    %v1381 = vunpack.c.h.b16 %v1117
    %v1382 = vunpack.c.l.b16 %v1118
    %v1383 = vunpack.c.l.b16 %v1119
    %v1384 = vunpack.c.l.b16 %v1120
    %v1385 = vunpack.c.h.b16 %v1118
    %v1386 = vunpack.c.h.b16 %v1119
    %v1387 = vunpack.c.h.b16 %v1120
    %v1388 = vunpack.c.l.b16 %v1121
    %v1389 = vunpack.c.l.b16 %v1122
    %v1390 = vunpack.c.l.b16 %v1123
    %v1391 = vunpack.c.h.b16 %v1121
    %v1392 = vunpack.c.h.b16 %v1122
    %v1393 = vunpack.c.h.b16 %v1123
    %v1394 = vunpack.c.l.b16 %v1124
    %v1395 = vunpack.c.l.b16 %v1125
    %v1396 = vunpack.c.l.b16 %v1126
    %v1397 = vunpack.c.h.b16 %v1124
    %v1398 = vunpack.c.h.b16 %v1125
    %v1399 = vunpack.c.h.b16 %v1126
    %v1400 = vunpack.c.l.b16 %v1127
    %v1401 = vunpack.c.l.b16 %v1128
    %v1402 = vunpack.c.l.b16 %v1129
    %v1403 = vunpack.c.h.b16 %v1127
    %v1404 = vunpack.c.h.b16 %v1128
    %v1405 = vunpack.c.h.b16 %v1129
    %v1406 = vunpack.c.l.b16 %v1130
    %v1407 = vunpack.c.l.b16 %v1131
    %v1408 = vunpack.c.l.b16 %v1132
    %v1409 = vunpack.c.h.b16 %v1130
    %v1410 = vunpack.c.h.b16 %v1131
    %v1411 = vunpack.c.h.b16 %v1132
    %v1412 = vunpack.c.l.b16 %v1133
    %v1413 = vunpack.c.l.b16 %v1134
    %v1414 = vunpack.c.l.b16 %v1135
    %v1415 = vunpack.c.h.b16 %v1133
    %v1416 = vunpack.c.h.b16 %v1134
    %v1417 = vunpack.c.h.b16 %v1135
    %v1418 = vunpack.c.l.b16 %v1136
    %v1419 = vunpack.c.l.b16 %v1137
    %v1420 = vunpack.c.l.b16 %v1138
    %v1421 = vunpack.c.h.b16 %v1136
    %v1422 = vunpack.c.h.b16 %v1137
    %v1423 = vunpack.c.h.b16 %v1138
    %v1424 = vunpack.c.l.b16 %v1139
    %v1425 = vunpack.c.l.b16 %v1140
    %v1426 = vunpack.c.l.b16 %v1141
    %v1427 = vunpack.c.h.b16 %v1139
    %v1428 = vunpack.c.h.b16 %v1140
    %v1429 = vunpack.c.h.b16 %v1141
    %v1430 = vpack.c.b16 %v1239, %v1238
    %v1431 = vpack.c.b16 %v1240, %v1240
    %v1432 = vpack.c.b16 %v1242, %v1241
    %v1433 = vpack.c.b16 %v1243, %v1243
    %v1434 = vpack.c.b16 %v1245, %v1244
    %v1435 = vpack.c.b16 %v1246, %v1246
    %v1436 = vpack.c.b16 %v1248, %v1247
    %v1437 = vpack.c.b16 %v1249, %v1249
    %v1438 = vpack.c.b16 %v1251, %v1250
    %v1439 = vpack.c.b16 %v1252, %v1252
    %v1440 = vpack.c.b16 %v1254, %v1253
    %v1441 = vpack.c.b16 %v1255, %v1255
    %v1442 = vpack.c.b16 %v1257, %v1256
    %v1443 = vpack.c.b16 %v1258, %v1258
    %v1444 = vpack.c.b16 %v1260, %v1259
    %v1445 = vpack.c.b16 %v1261, %v1261
    %v1446 = vpack.c.b16 %v1263, %v1262
    %v1447 = vpack.c.b16 %v1264, %v1264
    %v1448 = vpack.c.b16 %v1266, %v1265
    %v1449 = vpack.c.b16 %v1267, %v1267
    %v1450 = vpack.c.b16 %v1269, %v1268
    %v1451 = vpack.c.b16 %v1270, %v1270
    %v1452 = vpack.c.b16 %v1272, %v1271
    %v1453 = vpack.c.b16 %v1273, %v1273
    %v1454 = vpack.c.b16 %v1275, %v1274
    %v1455 = vpack.c.b16 %v1276, %v1276
    %v1456 = vpack.c.b16 %v1278, %v1277
    %v1457 = vpack.c.b16 %v1279, %v1279
    %v1458 = vpack.c.b16 %v1281, %v1280
    %v1459 = vpack.c.b16 %v1282, %v1282
    %v1460 = vpack.c.b16 %v1284, %v1283
    %v1461 = vpack.c.b16 %v1285, %v1285
    %v1462 = vpack.c.b16 %v1287, %v1286
    %v1463 = vpack.c.b16 %v1288, %v1288
    %v1464 = vpack.c.b16 %v1290, %v1289
    %v1465 = vpack.c.b16 %v1291, %v1291
    %v1466 = vpack.c.b16 %v1293, %v1292
    %v1467 = vpack.c.b16 %v1294, %v1294
    %v1468 = vpack.c.b16 %v1296, %v1295
    %v1469 = vpack.c.b16 %v1297, %v1297
    %v1470 = vpack.c.b16 %v1299, %v1298
    %v1471 = vpack.c.b16 %v1300, %v1300
    %v1472 = vpack.c.b16 %v1302, %v1301
    %v1473 = vpack.c.b16 %v1303, %v1303
    %v1474 = vpack.c.b16 %v1305, %v1304
    %v1475 = vpack.c.b16 %v1306, %v1306
    %v1476 = vpack.c.b16 %v1308, %v1307
    %v1477 = vpack.c.b16 %v1309, %v1309
    %v1478 = vpack.c.b16 %v1311, %v1310
    %v1479 = vpack.c.b16 %v1312, %v1312
    %v1480 = vpack.c.b16 %v1314, %v1313
    %v1481 = vpack.c.b16 %v1315, %v1315
    %v1482 = vpack.c.b16 %v1317, %v1316
    %v1483 = vpack.c.b16 %v1318, %v1318
    %v1484 = vpack.c.b16 %v1320, %v1319
    %v1485 = vpack.c.b16 %v1321, %v1321
    %v1486 = vpack.c.b16 %v1323, %v1322
    %v1487 = vpack.c.b16 %v1324, %v1324
    %v1488 = vpack.c.b16 %v1326, %v1325
    %v1489 = vpack.c.b16 %v1327, %v1327
    %v1490 = vpack.c.b16 %v1329, %v1328
    %v1491 = vpack.c.b16 %v1330, %v1330
    %v1492 = vpack.c.b16 %v1332, %v1331
    %v1493 = vpack.c.b16 %v1333, %v1333
    %v1494 = vpack.c.b16 %v1335, %v1334
    %v1495 = vpack.c.b16 %v1336, %v1336
    %v1496 = vpack.c.b16 %v1338, %v1337
    %v1497 = vpack.c.b16 %v1339, %v1339
    %v1498 = vpack.c.b16 %v1341, %v1340
    %v1499 = vpack.c.b16 %v1342, %v1342
    %v1500 = vpack.c.b16 %v1344, %v1343
    %v1501 = vpack.c.b16 %v1345, %v1345
    %v1502 = vpack.c.b16 %v1347, %v1346
    %v1503 = vpack.c.b16 %v1348, %v1348
    %v1504 = vpack.c.b16 %v1350, %v1349
    %v1505 = vpack.c.b16 %v1351, %v1351
    %v1506 = vpack.c.b16 %v1353, %v1352
    %v1507 = vpack.c.b16 %v1354, %v1354
    %v1508 = vpack.c.b16 %v1356, %v1355
    %v1509 = vpack.c.b16 %v1357, %v1357
    %v1510 = vpack.c.b16 %v1359, %v1358
    %v1511 = vpack.c.b16 %v1360, %v1360
    %v1512 = vpack.c.b16 %v1362, %v1361
    %v1513 = vpack.c.b16 %v1363, %v1363
    %v1514 = vpack.c.b16 %v1365, %v1364
    %v1515 = vpack.c.b16 %v1366, %v1366
    %v1516 = vpack.c.b16 %v1368, %v1367
    %v1517 = vpack.c.b16 %v1369, %v1369
    %v1518 = vpack.c.b16 %v1371, %v1370
    %v1519 = vpack.c.b16 %v1372, %v1372
    %v1520 = vpack.c.b16 %v1374, %v1373
    %v1521 = vpack.c.b16 %v1375, %v1375
    %v1522 = vpack.c.b16 %v1377, %v1376
    %v1523 = vpack.c.b16 %v1378, %v1378
    %v1524 = vpack.c.b16 %v1380, %v1379
    %v1525 = vpack.c.b16 %v1381, %v1381
    %v1526 = vpack.c.b16 %v1383, %v1382
    %v1527 = vpack.c.b16 %v1384, %v1384
    %v1528 = vpack.c.b16 %v1386, %v1385
    %v1529 = vpack.c.b16 %v1387, %v1387
    %v1530 = vpack.c.b16 %v1389, %v1388
    %v1531 = vpack.c.b16 %v1390, %v1390
    %v1532 = vpack.c.b16 %v1392, %v1391
    %v1533 = vpack.c.b16 %v1393, %v1393
    %v1534 = vpack.c.b16 %v1395, %v1394
    %v1535 = vpack.c.b16 %v1396, %v1396
    %v1536 = vpack.c.b16 %v1398, %v1397
    %v1537 = vpack.c.b16 %v1399, %v1399
    %v1538 = vpack.c.b16 %v1401, %v1400
    %v1539 = vpack.c.b16 %v1402, %v1402
    %v1540 = vpack.c.b16 %v1404, %v1403
    %v1541 = vpack.c.b16 %v1405, %v1405
    %v1542 = vpack.c.b16 %v1407, %v1406
    %v1543 = vpack.c.b16 %v1408, %v1408
    %v1544 = vpack.c.b16 %v1410, %v1409
    %v1545 = vpack.c.b16 %v1411, %v1411
    %v1546 = vpack.c.b16 %v1413, %v1412
    %v1547 = vpack.c.b16 %v1414, %v1414
    %v1548 = vpack.c.b16 %v1416, %v1415
    %v1549 = vpack.c.b16 %v1417, %v1417
    %v1550 = vpack.c.b16 %v1419, %v1418
    %v1551 = vpack.c.b16 %v1420, %v1420
    %v1552 = vpack.c.b16 %v1422, %v1421
    %v1553 = vpack.c.b16 %v1423, %v1423
    %v1554 = vpack.c.b16 %v1425, %v1424
    %v1555 = vpack.c.b16 %v1426, %v1426
    %v1556 = vpack.c.b16 %v1428, %v1427
    %v1557 = vpack.c.b16 %v1429, %v1429
    %1686 = vst [vmem:[#allocation8] sm:$0xff] %v1430
    %1687 = vst [vmem:[#allocation8 + $0x8] sm:$0xf] %v1431
    %1688 = vst [vmem:[#allocation8 + $0xc] sm:$0xff] %v1432
    %1689 = vst [vmem:[#allocation8 + $0x14] sm:$0xf] %v1433
    %1690 = vst [vmem:[#allocation8 + $0x18] sm:$0xff] %v1434
    %1691 = vst [vmem:[#allocation8 + $0x20] sm:$0xf] %v1435
    %1692 = vst [vmem:[#allocation8 + $0x24] sm:$0xff] %v1436
    %1693 = vst [vmem:[#allocation8 + $0x2c] sm:$0xf] %v1437
    %1694 = vst [vmem:[#allocation8 + $0x30] sm:$0xff] %v1438
    %1695 = vst [vmem:[#allocation8 + $0x38] sm:$0xf] %v1439
    %1696 = vst [vmem:[#allocation8 + $0x3c] sm:$0xff] %v1440
    %1697 = vst [vmem:[#allocation8 + $0x44] sm:$0xf] %v1441
    %1698 = vst [vmem:[#allocation8 + $0x48] sm:$0xff] %v1442
    %1699 = vst [vmem:[#allocation8 + $0x50] sm:$0xf] %v1443
    %1700 = vst [vmem:[#allocation8 + $0x54] sm:$0xff] %v1444
    %1701 = vst [vmem:[#allocation8 + $0x5c] sm:$0xf] %v1445
    %1702 = vst [vmem:[#allocation8 + $0x60] sm:$0xff] %v1446
    %1703 = vst [vmem:[#allocation8 + $0x68] sm:$0xf] %v1447
    %1704 = vst [vmem:[#allocation8 + $0x6c] sm:$0xff] %v1448
    %1705 = vst [vmem:[#allocation8 + $0x74] sm:$0xf] %v1449
    %1706 = vst [vmem:[#allocation8 + $0x78] sm:$0xff] %v1450
    %1707 = vst [vmem:[#allocation8 + $0x80] sm:$0xf] %v1451
    %1708 = vst [vmem:[#allocation8 + $0x84] sm:$0xff] %v1452
    %1709 = vst [vmem:[#allocation8 + $0x8c] sm:$0xf] %v1453
    %1710 = vst [vmem:[#allocation8 + $0x90] sm:$0xff] %v1454
    %1711 = vst [vmem:[#allocation8 + $0x98] sm:$0xf] %v1455
    %1712 = vst [vmem:[#allocation8 + $0x9c] sm:$0xff] %v1456
    %1713 = vst [vmem:[#allocation8 + $0xa4] sm:$0xf] %v1457
    %1714 = vst [vmem:[#allocation8 + $0xa8] sm:$0xff] %v1458
    %1715 = vst [vmem:[#allocation8 + $0xb0] sm:$0xf] %v1459
    %1716 = vst [vmem:[#allocation8 + $0xb4] sm:$0xff] %v1460
    %1717 = vst [vmem:[#allocation8 + $0xbc] sm:$0xf] %v1461
    %1718 = vst [vmem:[#allocation8 + $0xc0] sm:$0xff] %v1462
    %1719 = vst [vmem:[#allocation8 + $0xc8] sm:$0xf] %v1463
    %1720 = vst [vmem:[#allocation8 + $0xcc] sm:$0xff] %v1464
    %1721 = vst [vmem:[#allocation8 + $0xd4] sm:$0xf] %v1465
    %1722 = vst [vmem:[#allocation8 + $0xd8] sm:$0xff] %v1466
    %1723 = vst [vmem:[#allocation8 + $0xe0] sm:$0xf] %v1467
    %1724 = vst [vmem:[#allocation8 + $0xe4] sm:$0xff] %v1468
    %1725 = vst [vmem:[#allocation8 + $0xec] sm:$0xf] %v1469
    %1726 = vst [vmem:[#allocation8 + $0xf0] sm:$0xff] %v1470
    %1727 = vst [vmem:[#allocation8 + $0xf8] sm:$0xf] %v1471
    %1728 = vst [vmem:[#allocation8 + $0xfc] sm:$0xff] %v1472
    %1729 = vst [vmem:[#allocation8 + $0x104] sm:$0xf] %v1473
    %1730 = vst [vmem:[#allocation8 + $0x108] sm:$0xff] %v1474
    %1731 = vst [vmem:[#allocation8 + $0x110] sm:$0xf] %v1475
    %1732 = vst [vmem:[#allocation8 + $0x114] sm:$0xff] %v1476
    %1733 = vst [vmem:[#allocation8 + $0x11c] sm:$0xf] %v1477
    %1734 = vst [vmem:[#allocation8 + $0x120] sm:$0xff] %v1478
    %1735 = vst [vmem:[#allocation8 + $0x128] sm:$0xf] %v1479
    %1736 = vst [vmem:[#allocation8 + $0x12c] sm:$0xff] %v1480
    %1737 = vst [vmem:[#allocation8 + $0x134] sm:$0xf] %v1481
    %1738 = vst [vmem:[#allocation8 + $0x138] sm:$0xff] %v1482
    %1739 = vst [vmem:[#allocation8 + $0x140] sm:$0xf] %v1483
    %1740 = vst [vmem:[#allocation8 + $0x144] sm:$0xff] %v1484
    %1741 = vst [vmem:[#allocation8 + $0x14c] sm:$0xf] %v1485
    %1742 = vst [vmem:[#allocation8 + $0x150] sm:$0xff] %v1486
    %1743 = vst [vmem:[#allocation8 + $0x158] sm:$0xf] %v1487
    %1744 = vst [vmem:[#allocation8 + $0x15c] sm:$0xff] %v1488
    %1745 = vst [vmem:[#allocation8 + $0x164] sm:$0xf] %v1489
    %1746 = vst [vmem:[#allocation8 + $0x168] sm:$0xff] %v1490
    %1747 = vst [vmem:[#allocation8 + $0x170] sm:$0xf] %v1491
    %1748 = vst [vmem:[#allocation8 + $0x174] sm:$0xff] %v1492
    %1749 = vst [vmem:[#allocation8 + $0x17c] sm:$0xf] %v1493
    %1750 = vst [vmem:[#allocation8 + $0x180] sm:$0xff] %v1494
    %1751 = vst [vmem:[#allocation8 + $0x188] sm:$0xf] %v1495
    %1752 = vst [vmem:[#allocation8 + $0x18c] sm:$0xff] %v1496
    %1753 = vst [vmem:[#allocation8 + $0x194] sm:$0xf] %v1497
    %1754 = vst [vmem:[#allocation8 + $0x198] sm:$0xff] %v1498
    %1755 = vst [vmem:[#allocation8 + $0x1a0] sm:$0xf] %v1499
    %1756 = vst [vmem:[#allocation8 + $0x1a4] sm:$0xff] %v1500
    %1757 = vst [vmem:[#allocation8 + $0x1ac] sm:$0xf] %v1501
    %1758 = vst [vmem:[#allocation8 + $0x1b0] sm:$0xff] %v1502
    %1759 = vst [vmem:[#allocation8 + $0x1b8] sm:$0xf] %v1503
    %1760 = vst [vmem:[#allocation8 + $0x1bc] sm:$0xff] %v1504
    %1761 = vst [vmem:[#allocation8 + $0x1c4] sm:$0xf] %v1505
    %1762 = vst [vmem:[#allocation8 + $0x1c8] sm:$0xff] %v1506
    %1763 = vst [vmem:[#allocation8 + $0x1d0] sm:$0xf] %v1507
    %1764 = vst [vmem:[#allocation8 + $0x1d4] sm:$0xff] %v1508
    %1765 = vst [vmem:[#allocation8 + $0x1dc] sm:$0xf] %v1509
    %1766 = vst [vmem:[#allocation8 + $0x1e0] sm:$0xff] %v1510
    %1767 = vst [vmem:[#allocation8 + $0x1e8] sm:$0xf] %v1511
    %1768 = vst [vmem:[#allocation8 + $0x1ec] sm:$0xff] %v1512
    %1769 = vst [vmem:[#allocation8 + $0x1f4] sm:$0xf] %v1513
    %1770 = vst [vmem:[#allocation8 + $0x1f8] sm:$0xff] %v1514
    %1771 = vst [vmem:[#allocation8 + $0x200] sm:$0xf] %v1515
    %1772 = vst [vmem:[#allocation8 + $0x204] sm:$0xff] %v1516
    %1773 = vst [vmem:[#allocation8 + $0x20c] sm:$0xf] %v1517
    %1774 = vst [vmem:[#allocation8 + $0x210] sm:$0xff] %v1518
    %1775 = vst [vmem:[#allocation8 + $0x218] sm:$0xf] %v1519
    %1776 = vst [vmem:[#allocation8 + $0x21c] sm:$0xff] %v1520
    %1777 = vst [vmem:[#allocation8 + $0x224] sm:$0xf] %v1521
    %1778 = vst [vmem:[#allocation8 + $0x228] sm:$0xff] %v1522
    %1779 = vst [vmem:[#allocation8 + $0x230] sm:$0xf] %v1523
    %1780 = vst [vmem:[#allocation8 + $0x234] sm:$0xff] %v1524
    %1781 = vst [vmem:[#allocation8 + $0x23c] sm:$0xf] %v1525
    %1782 = vst [vmem:[#allocation8 + $0x240] sm:$0xff] %v1526
    %1783 = vst [vmem:[#allocation8 + $0x248] sm:$0xf] %v1527
    %1784 = vst [vmem:[#allocation8 + $0x24c] sm:$0xff] %v1528
    %1785 = vst [vmem:[#allocation8 + $0x254] sm:$0xf] %v1529
    %1786 = vst [vmem:[#allocation8 + $0x258] sm:$0xff] %v1530
    %1787 = vst [vmem:[#allocation8 + $0x260] sm:$0xf] %v1531
    %1788 = vst [vmem:[#allocation8 + $0x264] sm:$0xff] %v1532
    %1789 = vst [vmem:[#allocation8 + $0x26c] sm:$0xf] %v1533
    %1790 = vst [vmem:[#allocation8 + $0x270] sm:$0xff] %v1534
    %1791 = vst [vmem:[#allocation8 + $0x278] sm:$0xf] %v1535
    %1792 = vst [vmem:[#allocation8 + $0x27c] sm:$0xff] %v1536
    %1793 = vst [vmem:[#allocation8 + $0x284] sm:$0xf] %v1537
    %1794 = vst [vmem:[#allocation8 + $0x288] sm:$0xff] %v1538
    %1795 = vst [vmem:[#allocation8 + $0x290] sm:$0xf] %v1539
    %1796 = vst [vmem:[#allocation8 + $0x294] sm:$0xff] %v1540
    %1797 = vst [vmem:[#allocation8 + $0x29c] sm:$0xf] %v1541
    %1798 = vst [vmem:[#allocation8 + $0x2a0] sm:$0xff] %v1542
    %1799 = vst [vmem:[#allocation8 + $0x2a8] sm:$0xf] %v1543
    %1800 = vst [vmem:[#allocation8 + $0x2ac] sm:$0xff] %v1544
    %1801 = vst [vmem:[#allocation8 + $0x2b4] sm:$0xf] %v1545
    %1802 = vst [vmem:[#allocation8 + $0x2b8] sm:$0xff] %v1546
    %1803 = vst [vmem:[#allocation8 + $0x2c0] sm:$0xf] %v1547
    %1804 = vst [vmem:[#allocation8 + $0x2c4] sm:$0xff] %v1548
    %1805 = vst [vmem:[#allocation8 + $0x2cc] sm:$0xf] %v1549
    %1806 = vst [vmem:[#allocation8 + $0x2d0] sm:$0xff] %v1550
    %1807 = vst [vmem:[#allocation8 + $0x2d8] sm:$0xf] %v1551
    %1808 = vst [vmem:[#allocation8 + $0x2dc] sm:$0xff] %v1552
    %1809 = vst [vmem:[#allocation8 + $0x2e4] sm:$0xf] %v1553
    %1810 = vst [vmem:[#allocation8 + $0x2e8] sm:$0xff] %v1554
    %1811 = vst [vmem:[#allocation8 + $0x2f0] sm:$0xf] %v1555
    %1812 = vst [vmem:[#allocation8 + $0x2f4] sm:$0xff] %v1556
    %1813 = vst [vmem:[#allocation8 + $0x2fc] sm:$0xf] %v1557
    // Predicated region
    $region22: #{tpu_custom_call.1} parent=1 // pred_check
      _
    $region23: #{tpu_custom_call.1} parent=1 // pred_check_branch
      %1815 = sbr.rel (0) target = $region25
    $region24: #{tpu_custom_call.1} parent=1 // pred_region
      %s1817 = ssub.s32 8192, 8192
      %1818 = vsyncadd [#allocation4], %s1817
      %s1819 = sshll.u32 [#allocation7], 4
      %s1820 = int_to_ptr.vmem [resolvable:$true] %s1819
      %1825 = dma.vmem_to_hbm [thread:$0]  %s1820, 8192, %s3, [#allocation4], 128, 128, 8
    $region25: #{tpu_custom_call.1} parent=1 // pred_fallthru
      _
    // Predicated region
    $region26: #{tpu_custom_call.1} parent=1 // pred_check
      _
    $region27: #{tpu_custom_call.1} parent=1 // pred_check_branch
      %1827 = sbr.rel (0) target = $region29
    $region28: #{tpu_custom_call.1} parent=1 // pred_region
      %s1829 = ssub.s32 12288, 12288
      %1830 = vsyncadd [#allocation9], %s1829
      %s1831 = sshll.u32 [#allocation8], 4
      %s1832 = int_to_ptr.vmem [resolvable:$true] %s1831
      %1837 = dma.vmem_to_hbm [thread:$0]  %s1832, 12288, %s4, [#allocation9], 192, 192, 12
    $region29: #{tpu_custom_call.1} parent=1 // pred_fallthru
      _
    // Predicated region
    $region30: #{tpu_custom_call.1} parent=1 // pred_check
      _
    $region31: #{tpu_custom_call.1} parent=1 // pred_check_branch
      %1839 = sbr.rel (0) target = $region33
    $region32: #{tpu_custom_call.1} parent=1 // pred_region
      %1840 = dma.done [#allocation4], 8192
    $region33: #{tpu_custom_call.1} parent=1 // pred_fallthru
      _
    // Predicated region
    $region34: #{tpu_custom_call.1} parent=1 // pred_check
      _
    $region35: #{tpu_custom_call.1} parent=1 // pred_check_branch
      %1842 = sbr.rel (0) target = $region37
    $region36: #{tpu_custom_call.1} parent=1 // pred_region
      %1843 = dma.done [#allocation9], 12288
    $region37: #{tpu_custom_call.1} parent=1 // pred_fallthru
      _
    %1844 = vsyncpa [#allocation3], 1
    %1845 = vsyncpa [#allocation6], 1
    %1846 = vsyncpa [#allocation4], 1
    %1847 = vsyncpa [#allocation9], 1

</llo_original>
